<compile_context>
chip_gen: v7x
topology: tpu7x:2x2x1
jax: 0.10.0
libtpu: 0.0.40
codegen_flags: <defaults>
</compile_context>

<pallas_src>
import jax
import jax.numpy as jnp
import numpy as np
from jax.experimental import pallas as pl
from jax.experimental.pallas import tpu as pltpu

# ---- hyperparameters implied by the module (small, synthetic) ---------------
B = 2               # batch_size
L = 16              # sequence length
D = 32              # embedding_dim
V = 50              # vocab_size
KS = (3, 4, 5)      # args.kernel_sizes
CO = 8              # args.kernel_num  (== CapsuleLayer in_unit)
LKS = tuple(L - k + 1 for k in KS)
N = sum(LKS)        # routing_unit_num (== CapsuleLayer in_channel) = 39
J = 2               # CapsuleLayer num_unit (label_size)
UNIT = 16           # args.unit_size
NUM_ROUTING = 3     # args.num_routing
NC = N * CO         # 312
NCP = 384           # NC padded to a lane multiple (3 * 128)
EPS = 1e-9


def _squash_factor(mag_sq):
    # (|s|^2 / (1 + |s|^2)) / |s|  with eps; reciprocal/rsqrt on the EUP slot.
    return (mag_sq * pl.reciprocal(1.0 + mag_sq, approx=True)
            * jax.lax.rsqrt(mag_sq + EPS))


# ---------------- single fused Pallas kernel ---------------------------------
def fused_kernel(emb_ref, wconv_ref, bconv_ref, wcat_ref, seg_ref, segt_ref,
                 out_ref):
    # emb_ref   : [B, L*D]       f32   flattened embeddings
    # wconv_ref : [L*D, NCP]     bf16  Toeplitz-packed conv weights (all widths)
    # bconv_ref : [1, NCP]       f32   packed conv bias (zero in padding)
    # wcat_ref  : [NCP, J*UNIT]  bf16  wcat[n*CO+i, j*UNIT+d] = W[j,n,d,i]
    # seg_ref   : [NCP, N]       bf16  0/1 channel->capsule segment matrix
    # segt_ref  : [N, NCP]       bf16  its transpose (capsule->channel bcast)
    # out_ref   : [B, J*UNIT]    f32
    f32 = jnp.float32

    # One-time upcast of the bf16-packed constants (DMA moved them half-width).
    wconv = wconv_ref[...].astype(f32)
    wcat = wcat_ref[...].astype(f32)
    seg = seg_ref[...].astype(f32)
    segT = segt_ref[...].astype(f32)

    # Tiny (1-vreg) block-diagonal mask: stacked rows j*B..j*B+B-1 keep only
    # capsule j's UNIT output lanes.  (J == 2, so a single comparison works.)
    r = jax.lax.broadcasted_iota(jnp.int32, (J * B, J * UNIT), 0)
    c = jax.lax.broadcasted_iota(jnp.int32, (J * B, J * UNIT), 1)
    blkmask = jnp.where((r < B) == (c < UNIT), 1.0, 0.0).astype(f32)

    # ---- all conv widths as ONE MXU matmul + bias ---------------------------
    pre = jnp.dot(emb_ref[...], wconv, preferred_element_type=f32)
    pre = pre + bconv_ref[...]                                      # [B, NCP]

    # ---- squash over each capsule's CO channels (torch squash(x, dim=1)) ----
    mag = jnp.dot(pre * pre, seg, preferred_element_type=f32)       # [B, N]
    u = pre * jnp.dot(_squash_factor(mag), segT,
                      preferred_element_type=f32)                   # [B, NCP]

    # u replicated for the J-stacked matmuls: rows j*B+b hold u[b].
    ustack = jnp.concatenate([u, u], axis=0)                        # [J*B, NCP]

    # ---- dynamic routing, J = 2 capsules fused into stacked matmuls ---------
    # TODO(synk): CapsuleLayer source (and its use of vocab / x_original /
    # mode / epoch) is not provided; standard Sabour-style routing with
    # batch-shared logits is kept, matching the previous implementation.
    def capsules(cu, need_agree):
        # cu: [J*B, NCP], rows j*B+b hold coupling-weighted u for (j, b).
        scat = jnp.dot(cu, wcat, preferred_element_type=f32)        # [J*B, J*U]
        sblk = scat * blkmask                                       # own block
        msq = jnp.sum(sblk * sblk, axis=-1, keepdims=True)          # [J*B, 1]
        vblk = sblk * _squash_factor(msq)                           # [J*B, J*U]
        if not need_agree:
            return vblk, None
        # wv[j*B+b] = v_j[b] @ W_j^T  (transposed-RHS contraction, no wcapsT).
        wv = jax.lax.dot_general(vblk, wcat, (((1,), (1,)), ((), ())),
                                 preferred_element_type=f32)        # [J*B, NCP]
        agree = jnp.dot(ustack * wv, seg, preferred_element_type=f32)  # [J*B,N]
        upd = jnp.concatenate(
            [jnp.mean(agree[:B], axis=0, keepdims=True),
             jnp.mean(agree[B:], axis=0, keepdims=True)], axis=0)   # [J, N]
        return vblk, upd

    # Iteration 0 peeled: zero logits -> coupling == 1/J exactly (no softmax,
    # no coupling-broadcast matmul; numerically identical to the reference).
    vblk, upd = capsules((1.0 / J) * ustack, need_agree=(NUM_ROUTING > 1))
    logits = upd                                                    # [J, N]

    for it in range(1, NUM_ROUTING):
        m = jnp.max(logits, axis=0, keepdims=True)
        e = jnp.exp(logits - m)
        coup = e * pl.reciprocal(jnp.sum(e, axis=0, keepdims=True),
                                 approx=True)                       # [J, N]
        cexp = jnp.dot(coup, segT, preferred_element_type=f32)      # [J, NCP]
        cu = jnp.concatenate([u * cexp[0:1, :], u * cexp[1:2, :]], axis=0)
        last = (it == NUM_ROUTING - 1)
        vblk, upd = capsules(cu, need_agree=not last)
        if not last:
            logits = logits + upd    # final-iteration logit update is dead work

    # vblk is block-diagonal: rows 0..B-1 carry v0 in lanes [0,UNIT), rows
    # B..2B-1 carry v1 in lanes [UNIT,2*UNIT).  Adding the halves yields the
    # [B, J*UNIT] output with no lane-concat.
    out_ref[...] = vblk[:B, :] + vblk[B:, :]


# ---------------- wrapper -----------------------------------------------------
def simple_classifier_forward(tokens, packed):
    # tokens: [L, B] int32 (torch forward receives [seq, batch] and permutes)
    x = tokens.T                                                    # [B, L]
    emb = jnp.take(packed["embedding"], x, axis=0)                  # [B, L, D]
    emb_flat = emb.reshape(B, L * D).astype(jnp.float32)

    out = pl.pallas_call(
        fused_kernel,
        out_shape=jax.ShapeDtypeStruct((B, J * UNIT), jnp.float32),
        in_specs=[pl.BlockSpec(memory_space=pltpu.MemorySpace.VMEM)] * 6,
        out_specs=pl.BlockSpec(memory_space=pltpu.MemorySpace.VMEM),
    )(emb_flat, packed["conv_w_big"], packed["conv_b_flat"],
      packed["caps_w_cat"], packed["seg"], packed["segT"])

    # TODO(synk): nn.Dropout is identity at inference; training dropout not modeled.
    return out.reshape(B, J, UNIT)


# ---------------- parameter init / one-time packing ---------------------------
def init_params(key):
    k_emb, k_cw, k_cb, k_caps = jax.random.split(key, 4)
    conv_w = []
    for i, k in enumerate(KS):
        # torch weight [CO, 1, K, D] flattened row-major over (K, D), transposed
        wk = jax.random.normal(jax.random.fold_in(k_cw, i), (k * D, CO),
                               dtype=jnp.float32) * 0.1
        conv_w.append(wk)
    return {
        "embedding": jax.random.normal(k_emb, (V, D), dtype=jnp.float32) * 0.1,
        "conv_w": conv_w,
        "conv_b": jax.random.normal(k_cb, (len(KS), CO), dtype=jnp.float32) * 0.01,
        # torch param [1, N, J, UNIT, CO] -> stored as [J, N, UNIT, CO]
        "caps_w": jax.random.normal(k_caps, (J, N, UNIT, CO), dtype=jnp.float32) * 0.1,
    }


def pack_params(params):
    """One-time packing of torch-style params into kernel-friendly layouts."""
    # Toeplitz conv weights, columns padded NC -> NCP (zeros).
    wbig = np.zeros((L * D, NCP), np.float32)
    bflat = np.zeros((1, NCP), np.float32)
    conv_w = [np.asarray(w) for w in params["conv_w"]]
    conv_b = np.asarray(params["conv_b"])
    off = 0
    for ki, k in enumerate(KS):
        lk = L - k + 1
        for t in range(lk):
            col = (off + t) * CO
            wbig[t * D:(t + k) * D, col:col + CO] = conv_w[ki]
            bflat[0, col:col + CO] = conv_b[ki]
        off += lk

    # Concatenated capsule weight: wcat[n*CO+i, j*UNIT+d] = W[j, n, d, i].
    caps = np.asarray(params["caps_w"])                              # [J,N,UNIT,CO]
    wflat = np.transpose(caps, (0, 1, 3, 2)).reshape(J, NC, UNIT)    # [J,NC,UNIT]
    wcat = np.zeros((NCP, J * UNIT), np.float32)
    wcat[:NC, :] = np.transpose(wflat, (1, 0, 2)).reshape(NC, J * UNIT)

    # 0/1 capsule-segment matrices (padded channels map to no capsule).
    seg = np.zeros((NCP, N), np.float32)
    for n in range(N):
        seg[n * CO:(n + 1) * CO, n] = 1.0
    segT = np.ascontiguousarray(seg.T)

    return {
        "embedding": params["embedding"],
        "conv_w_big": jnp.asarray(wbig, dtype=jnp.bfloat16),
        "conv_b_flat": jnp.asarray(bflat),                           # f32, tiny
        "caps_w_cat": jnp.asarray(wcat, dtype=jnp.bfloat16),
        "seg": jnp.asarray(seg, dtype=jnp.bfloat16),
        "segT": jnp.asarray(segT, dtype=jnp.bfloat16),
    }


# ---------------- pure-JAX reference (original f32 semantics) -----------------
def _squash_ref(s, axis=-1):
    mag_sq = jnp.sum(s * s, axis=axis, keepdims=True)
    return s * (mag_sq / (1.0 + mag_sq)) * jax.lax.rsqrt(mag_sq + EPS)


def reference_forward(tokens, params):
    x = tokens.T
    emb = jnp.take(params["embedding"], x, axis=0)                    # [B, L, D]
    convs = []
    for ki, k in enumerate(KS):
        lk = L - k + 1
        win = jnp.stack([emb[:, s:s + lk, :] for s in range(k)], axis=2)
        patch = win.reshape(B, lk, k * D)
        convs.append(jnp.einsum("blf,fc->blc", patch, params["conv_w"][ki])
                     + params["conv_b"][ki])
    conv = jnp.concatenate(convs, axis=1)                             # [B, N, CO]
    u = _squash_ref(conv, axis=-1)
    W = params["caps_w"]                                              # [J,N,UNIT,CO]
    u_hat = jnp.einsum("bni,jndi->jbnd", u, W)                        # [J,B,N,UNIT]
    blog = jnp.zeros((J, N), jnp.float32)
    v = None
    for _ in range(NUM_ROUTING):
        cc = jax.nn.softmax(blog, axis=0)                             # [J, N]
        s = jnp.einsum("jn,jbnd->jbd", cc, u_hat)
        v = _squash_ref(s, axis=-1)
        agree = jnp.einsum("jbnd,jbd->jbn", u_hat, v)
        blog = blog + jnp.mean(agree, axis=1)
    return jnp.transpose(v, (1, 0, 2))                                # [B, J, UNIT]


if __name__ == "__main__":
    key = jax.random.PRNGKey(0)
    pkey, tkey = jax.random.split(key)
    params = init_params(pkey)
    packed = pack_params(params)
    tokens = jax.random.randint(tkey, (L, B), 0, V, dtype=jnp.int32)  # [seq, batch]

    out = jax.jit(simple_classifier_forward)(tokens, packed)
    out = jax.block_until_ready(out)

    assert out.shape == (B, J, UNIT), out.shape
    assert bool(jnp.all(jnp.isfinite(out)))

    ref = reference_forward(tokens, params)
    max_err = float(jnp.max(jnp.abs(out - ref)))
    assert max_err < 2e-2, f"mismatch vs reference: {max_err}"
    print("KERNEL_OK")
</pallas_src>

<mosaic_0001>
module attributes {stable_mosaic.version = 11 : i64} {
  func.func @fused_kernel(%arg0: memref<2x512xf32, #tpu.memory_space<vmem>>, %arg1: memref<512x384xbf16, #tpu.memory_space<vmem>>, %arg2: memref<1x384xf32, #tpu.memory_space<vmem>>, %arg3: memref<384x32xbf16, #tpu.memory_space<vmem>>, %arg4: memref<384x39xbf16, #tpu.memory_space<vmem>>, %arg5: memref<39x384xbf16, #tpu.memory_space<vmem>>, %arg6: memref<2x32xf32, #tpu.memory_space<vmem>>) attributes {dimension_semantics = [], scalar_prefetch = 0 : i64, scratch_operands = 0 : i64, tpu.core_type = #tpu.core_type<tc>} {
    %c0 = arith.constant 0 : index
    %c0_0 = arith.constant 0 : index
    %0 = vector.load %arg1[%c0, %c0_0] : memref<512x384xbf16, #tpu.memory_space<vmem>>, vector<512x384xbf16>
    %1 = arith.extf %0 : vector<512x384xbf16> to vector<512x384xf32>
    %c0_1 = arith.constant 0 : index
    %c0_2 = arith.constant 0 : index
    %2 = vector.load %arg3[%c0_1, %c0_2] : memref<384x32xbf16, #tpu.memory_space<vmem>>, vector<384x32xbf16>
    %3 = arith.extf %2 : vector<384x32xbf16> to vector<384x32xf32>
    %c0_3 = arith.constant 0 : index
    %c0_4 = arith.constant 0 : index
    %4 = vector.load %arg4[%c0_3, %c0_4] : memref<384x39xbf16, #tpu.memory_space<vmem>>, vector<384x39xbf16>
    %5 = arith.extf %4 : vector<384x39xbf16> to vector<384x39xf32>
    %c0_5 = arith.constant 0 : index
    %c0_6 = arith.constant 0 : index
    %6 = vector.load %arg5[%c0_5, %c0_6] : memref<39x384xbf16, #tpu.memory_space<vmem>>, vector<39x384xbf16>
    %7 = arith.extf %6 : vector<39x384xbf16> to vector<39x384xf32>
    %8 = tpu.iota {dimensions = array<i32: 0>} : vector<4x32xi32>
    %9 = tpu.iota {dimensions = array<i32: 1>} : vector<4x32xi32>
    %c2_i32 = arith.constant 2 : i32
    %10 = vector.broadcast %c2_i32 : i32 to vector<4x32xi32>
    %11 = arith.cmpi slt, %8, %10 : vector<4x32xi32>
    %c16_i32 = arith.constant 16 : i32
    %12 = vector.broadcast %c16_i32 : i32 to vector<4x32xi32>
    %13 = arith.cmpi slt, %9, %12 : vector<4x32xi32>
    %14 = arith.xori %11, %13 : vector<4x32xi1>
    %cst = arith.constant dense<true> : vector<4x32xi1>
    %15 = arith.xori %14, %cst : vector<4x32xi1>
    %cst_7 = arith.constant 1.000000e+00 : f32
    %cst_8 = arith.constant 0.000000e+00 : f32
    %16 = vector.broadcast %cst_7 : f32 to vector<4x32xf32>
    %17 = vector.broadcast %cst_8 : f32 to vector<4x32xf32>
    %18 = arith.select %15, %16, %17 : vector<4x32xi1>, vector<4x32xf32>
    %c0_9 = arith.constant 0 : index
    %c0_10 = arith.constant 0 : index
    %19 = vector.load %arg0[%c0_9, %c0_10] : memref<2x512xf32, #tpu.memory_space<vmem>>, vector<2x512xf32>
    %cst_11 = arith.constant dense<0.000000e+00> : vector<2x384xf32>
    %20 = tpu.matmul %19, %1, %cst_11 {dimension_numbers = #tpu.dot_dimension_numbers<[1], [0], [0], [1], [0, 0, 1, 1], [], []>} : vector<2x512xf32>, vector<512x384xf32>, vector<2x384xf32> -> vector<2x384xf32>
    %c0_12 = arith.constant 0 : index
    %c0_13 = arith.constant 0 : index
    %21 = vector.load %arg2[%c0_12, %c0_13] : memref<1x384xf32, #tpu.memory_space<vmem>>, vector<1x384xf32>
    %22 = vector.broadcast %21 : vector<1x384xf32> to vector<2x384xf32>
    %23 = arith.addf %20, %22 : vector<2x384xf32>
    %24 = arith.mulf %23, %23 : vector<2x384xf32>
    %cst_14 = arith.constant dense<0.000000e+00> : vector<2x39xf32>
    %25 = tpu.matmul %24, %5, %cst_14 {dimension_numbers = #tpu.dot_dimension_numbers<[1], [0], [0], [1], [0, 0, 1, 1], [], []>} : vector<2x384xf32>, vector<384x39xf32>, vector<2x39xf32> -> vector<2x39xf32>
    %cst_15 = arith.constant 1.000000e+00 : f32
    %26 = vector.broadcast %cst_15 : f32 to vector<2x39xf32>
    %27 = arith.addf %26, %25 : vector<2x39xf32>
    %28 = tpu.reciprocal %27 {approx = true} : vector<2x39xf32> -> vector<2x39xf32>
    %29 = arith.mulf %25, %28 : vector<2x39xf32>
    %cst_16 = arith.constant 9.99999971E-10 : f32
    %30 = vector.broadcast %cst_16 : f32 to vector<2x39xf32>
    %31 = arith.addf %25, %30 : vector<2x39xf32>
    %32 = math.rsqrt %31 : vector<2x39xf32>
    %33 = arith.mulf %29, %32 : vector<2x39xf32>
    %cst_17 = arith.constant dense<0.000000e+00> : vector<2x384xf32>
    %34 = tpu.matmul %33, %7, %cst_17 {dimension_numbers = #tpu.dot_dimension_numbers<[1], [0], [0], [1], [0, 0, 1, 1], [], []>} : vector<2x39xf32>, vector<39x384xf32>, vector<2x384xf32> -> vector<2x384xf32>
    %35 = arith.mulf %23, %34 : vector<2x384xf32>
    %36 = tpu.concatenate %35, %35 in 0 : vector<2x384xf32>, vector<2x384xf32> -> vector<4x384xf32>
    %cst_18 = arith.constant 5.000000e-01 : f32
    %37 = vector.broadcast %cst_18 : f32 to vector<4x384xf32>
    %38 = arith.mulf %37, %36 : vector<4x384xf32>
    %cst_19 = arith.constant dense<0.000000e+00> : vector<4x32xf32>
    %39 = tpu.matmul %38, %3, %cst_19 {dimension_numbers = #tpu.dot_dimension_numbers<[1], [0], [0], [1], [0, 0, 1, 1], [], []>} : vector<4x384xf32>, vector<384x32xf32>, vector<4x32xf32> -> vector<4x32xf32>
    %40 = arith.mulf %39, %18 : vector<4x32xf32>
    %41 = arith.mulf %40, %40 : vector<4x32xf32>
    %cst_20 = arith.constant dense<0.000000e+00> : vector<4xf32>
    %42 = vector.multi_reduction <add>, %41, %cst_20 [1] : vector<4x32xf32> to vector<4xf32>
    %43 = vector.shape_cast %42 : vector<4xf32> to vector<4x1xf32>
    %cst_21 = arith.constant 1.000000e+00 : f32
    %44 = vector.broadcast %cst_21 : f32 to vector<4x1xf32>
    %45 = arith.addf %44, %43 : vector<4x1xf32>
    %46 = tpu.reciprocal %45 {approx = true} : vector<4x1xf32> -> vector<4x1xf32>
    %47 = arith.mulf %43, %46 : vector<4x1xf32>
    %cst_22 = arith.constant 9.99999971E-10 : f32
    %48 = vector.broadcast %cst_22 : f32 to vector<4x1xf32>
    %49 = arith.addf %43, %48 : vector<4x1xf32>
    %50 = math.rsqrt %49 : vector<4x1xf32>
    %51 = arith.mulf %47, %50 : vector<4x1xf32>
    %52 = vector.broadcast %51 : vector<4x1xf32> to vector<4x32xf32>
    %53 = arith.mulf %40, %52 : vector<4x32xf32>
    %cst_23 = arith.constant dense<0.000000e+00> : vector<4x384xf32>
    %54 = tpu.matmul %53, %3, %cst_23 {dimension_numbers = #tpu.dot_dimension_numbers<[1], [1], [0], [0], [0, 0, 1, 0], [], []>} : vector<4x32xf32>, vector<384x32xf32>, vector<4x384xf32> -> vector<4x384xf32>
    %55 = arith.mulf %36, %54 : vector<4x384xf32>
    %cst_24 = arith.constant dense<0.000000e+00> : vector<4x39xf32>
    %56 = tpu.matmul %55, %5, %cst_24 {dimension_numbers = #tpu.dot_dimension_numbers<[1], [0], [0], [1], [0, 0, 1, 1], [], []>} : vector<4x384xf32>, vector<384x39xf32>, vector<4x39xf32> -> vector<4x39xf32>
    %57 = vector.extract_strided_slice %56 {offsets = [0, 0], sizes = [2, 39], strides = [1, 1]} : vector<4x39xf32> to vector<2x39xf32>
    %cst_25 = arith.constant dense<0.000000e+00> : vector<39xf32>
    %58 = vector.multi_reduction <add>, %57, %cst_25 [0] : vector<2x39xf32> to vector<39xf32>
    %59 = vector.shape_cast %58 : vector<39xf32> to vector<1x39xf32>
    %cst_26 = arith.constant 2.000000e+00 : f32
    %60 = vector.broadcast %cst_26 : f32 to vector<1x39xf32>
    %61 = arith.divf %59, %60 : vector<1x39xf32>
    %62 = vector.extract_strided_slice %56 {offsets = [2, 0], sizes = [2, 39], strides = [1, 1]} : vector<4x39xf32> to vector<2x39xf32>
    %cst_27 = arith.constant dense<0.000000e+00> : vector<39xf32>
    %63 = vector.multi_reduction <add>, %62, %cst_27 [0] : vector<2x39xf32> to vector<39xf32>
    %64 = vector.shape_cast %63 : vector<39xf32> to vector<1x39xf32>
    %cst_28 = arith.constant 2.000000e+00 : f32
    %65 = vector.broadcast %cst_28 : f32 to vector<1x39xf32>
    %66 = arith.divf %64, %65 : vector<1x39xf32>
    %67 = tpu.concatenate %61, %66 in 0 : vector<1x39xf32>, vector<1x39xf32> -> vector<2x39xf32>
    %cst_29 = arith.constant dense<0xFF800000> : vector<39xf32>
    %68 = vector.multi_reduction <maximumf>, %67, %cst_29 [0] : vector<2x39xf32> to vector<39xf32>
    %69 = vector.shape_cast %68 : vector<39xf32> to vector<1x39xf32>
    %70 = vector.broadcast %69 : vector<1x39xf32> to vector<2x39xf32>
    %71 = arith.subf %67, %70 : vector<2x39xf32>
    %72 = math.exp %71 : vector<2x39xf32>
    %cst_30 = arith.constant dense<0.000000e+00> : vector<39xf32>
    %73 = vector.multi_reduction <add>, %72, %cst_30 [0] : vector<2x39xf32> to vector<39xf32>
    %74 = vector.shape_cast %73 : vector<39xf32> to vector<1x39xf32>
    %75 = tpu.reciprocal %74 {approx = true} : vector<1x39xf32> -> vector<1x39xf32>
    %76 = vector.broadcast %75 : vector<1x39xf32> to vector<2x39xf32>
    %77 = arith.mulf %72, %76 : vector<2x39xf32>
    %cst_31 = arith.constant dense<0.000000e+00> : vector<2x384xf32>
    %78 = tpu.matmul %77, %7, %cst_31 {dimension_numbers = #tpu.dot_dimension_numbers<[1], [0], [0], [1], [0, 0, 1, 1], [], []>} : vector<2x39xf32>, vector<39x384xf32>, vector<2x384xf32> -> vector<2x384xf32>
    %79 = vector.extract_strided_slice %78 {offsets = [0, 0], sizes = [1, 384], strides = [1, 1]} : vector<2x384xf32> to vector<1x384xf32>
    %80 = vector.broadcast %79 : vector<1x384xf32> to vector<2x384xf32>
    %81 = arith.mulf %35, %80 : vector<2x384xf32>
    %82 = vector.extract_strided_slice %78 {offsets = [1, 0], sizes = [1, 384], strides = [1, 1]} : vector<2x384xf32> to vector<1x384xf32>
    %83 = vector.broadcast %82 : vector<1x384xf32> to vector<2x384xf32>
    %84 = arith.mulf %35, %83 : vector<2x384xf32>
    %85 = tpu.concatenate %81, %84 in 0 : vector<2x384xf32>, vector<2x384xf32> -> vector<4x384xf32>
    %cst_32 = arith.constant dense<0.000000e+00> : vector<4x32xf32>
    %86 = tpu.matmul %85, %3, %cst_32 {dimension_numbers = #tpu.dot_dimension_numbers<[1], [0], [0], [1], [0, 0, 1, 1], [], []>} : vector<4x384xf32>, vector<384x32xf32>, vector<4x32xf32> -> vector<4x32xf32>
    %87 = arith.mulf %86, %18 : vector<4x32xf32>
    %88 = arith.mulf %87, %87 : vector<4x32xf32>
    %cst_33 = arith.constant dense<0.000000e+00> : vector<4xf32>
    %89 = vector.multi_reduction <add>, %88, %cst_33 [1] : vector<4x32xf32> to vector<4xf32>
    %90 = vector.shape_cast %89 : vector<4xf32> to vector<4x1xf32>
    %cst_34 = arith.constant 1.000000e+00 : f32
    %91 = vector.broadcast %cst_34 : f32 to vector<4x1xf32>
    %92 = arith.addf %91, %90 : vector<4x1xf32>
    %93 = tpu.reciprocal %92 {approx = true} : vector<4x1xf32> -> vector<4x1xf32>
    %94 = arith.mulf %90, %93 : vector<4x1xf32>
    %cst_35 = arith.constant 9.99999971E-10 : f32
    %95 = vector.broadcast %cst_35 : f32 to vector<4x1xf32>
    %96 = arith.addf %90, %95 : vector<4x1xf32>
    %97 = math.rsqrt %96 : vector<4x1xf32>
    %98 = arith.mulf %94, %97 : vector<4x1xf32>
    %99 = vector.broadcast %98 : vector<4x1xf32> to vector<4x32xf32>
    %100 = arith.mulf %87, %99 : vector<4x32xf32>
    %cst_36 = arith.constant dense<0.000000e+00> : vector<4x384xf32>
    %101 = tpu.matmul %100, %3, %cst_36 {dimension_numbers = #tpu.dot_dimension_numbers<[1], [1], [0], [0], [0, 0, 1, 0], [], []>} : vector<4x32xf32>, vector<384x32xf32>, vector<4x384xf32> -> vector<4x384xf32>
    %102 = arith.mulf %36, %101 : vector<4x384xf32>
    %cst_37 = arith.constant dense<0.000000e+00> : vector<4x39xf32>
    %103 = tpu.matmul %102, %5, %cst_37 {dimension_numbers = #tpu.dot_dimension_numbers<[1], [0], [0], [1], [0, 0, 1, 1], [], []>} : vector<4x384xf32>, vector<384x39xf32>, vector<4x39xf32> -> vector<4x39xf32>
    %104 = vector.extract_strided_slice %103 {offsets = [0, 0], sizes = [2, 39], strides = [1, 1]} : vector<4x39xf32> to vector<2x39xf32>
    %cst_38 = arith.constant dense<0.000000e+00> : vector<39xf32>
    %105 = vector.multi_reduction <add>, %104, %cst_38 [0] : vector<2x39xf32> to vector<39xf32>
    %106 = vector.shape_cast %105 : vector<39xf32> to vector<1x39xf32>
    %cst_39 = arith.constant 2.000000e+00 : f32
    %107 = vector.broadcast %cst_39 : f32 to vector<1x39xf32>
    %108 = arith.divf %106, %107 : vector<1x39xf32>
    %109 = vector.extract_strided_slice %103 {offsets = [2, 0], sizes = [2, 39], strides = [1, 1]} : vector<4x39xf32> to vector<2x39xf32>
    %cst_40 = arith.constant dense<0.000000e+00> : vector<39xf32>
    %110 = vector.multi_reduction <add>, %109, %cst_40 [0] : vector<2x39xf32> to vector<39xf32>
    %111 = vector.shape_cast %110 : vector<39xf32> to vector<1x39xf32>
    %cst_41 = arith.constant 2.000000e+00 : f32
    %112 = vector.broadcast %cst_41 : f32 to vector<1x39xf32>
    %113 = arith.divf %111, %112 : vector<1x39xf32>
    %114 = tpu.concatenate %108, %113 in 0 : vector<1x39xf32>, vector<1x39xf32> -> vector<2x39xf32>
    %115 = arith.addf %67, %114 : vector<2x39xf32>
    %cst_42 = arith.constant dense<0xFF800000> : vector<39xf32>
    %116 = vector.multi_reduction <maximumf>, %115, %cst_42 [0] : vector<2x39xf32> to vector<39xf32>
    %117 = vector.shape_cast %116 : vector<39xf32> to vector<1x39xf32>
    %118 = vector.broadcast %117 : vector<1x39xf32> to vector<2x39xf32>
    %119 = arith.subf %115, %118 : vector<2x39xf32>
    %120 = math.exp %119 : vector<2x39xf32>
    %cst_43 = arith.constant dense<0.000000e+00> : vector<39xf32>
    %121 = vector.multi_reduction <add>, %120, %cst_43 [0] : vector<2x39xf32> to vector<39xf32>
    %122 = vector.shape_cast %121 : vector<39xf32> to vector<1x39xf32>
    %123 = tpu.reciprocal %122 {approx = true} : vector<1x39xf32> -> vector<1x39xf32>
    %124 = vector.broadcast %123 : vector<1x39xf32> to vector<2x39xf32>
    %125 = arith.mulf %120, %124 : vector<2x39xf32>
    %cst_44 = arith.constant dense<0.000000e+00> : vector<2x384xf32>
    %126 = tpu.matmul %125, %7, %cst_44 {dimension_numbers = #tpu.dot_dimension_numbers<[1], [0], [0], [1], [0, 0, 1, 1], [], []>} : vector<2x39xf32>, vector<39x384xf32>, vector<2x384xf32> -> vector<2x384xf32>
    %127 = vector.extract_strided_slice %126 {offsets = [0, 0], sizes = [1, 384], strides = [1, 1]} : vector<2x384xf32> to vector<1x384xf32>
    %128 = vector.broadcast %127 : vector<1x384xf32> to vector<2x384xf32>
    %129 = arith.mulf %35, %128 : vector<2x384xf32>
    %130 = vector.extract_strided_slice %126 {offsets = [1, 0], sizes = [1, 384], strides = [1, 1]} : vector<2x384xf32> to vector<1x384xf32>
    %131 = vector.broadcast %130 : vector<1x384xf32> to vector<2x384xf32>
    %132 = arith.mulf %35, %131 : vector<2x384xf32>
    %133 = tpu.concatenate %129, %132 in 0 : vector<2x384xf32>, vector<2x384xf32> -> vector<4x384xf32>
    %cst_45 = arith.constant dense<0.000000e+00> : vector<4x32xf32>
    %134 = tpu.matmul %133, %3, %cst_45 {dimension_numbers = #tpu.dot_dimension_numbers<[1], [0], [0], [1], [0, 0, 1, 1], [], []>} : vector<4x384xf32>, vector<384x32xf32>, vector<4x32xf32> -> vector<4x32xf32>
    %135 = arith.mulf %134, %18 : vector<4x32xf32>
    %136 = arith.mulf %135, %135 : vector<4x32xf32>
    %cst_46 = arith.constant dense<0.000000e+00> : vector<4xf32>
    %137 = vector.multi_reduction <add>, %136, %cst_46 [1] : vector<4x32xf32> to vector<4xf32>
    %138 = vector.shape_cast %137 : vector<4xf32> to vector<4x1xf32>
    %cst_47 = arith.constant 1.000000e+00 : f32
    %139 = vector.broadcast %cst_47 : f32 to vector<4x1xf32>
    %140 = arith.addf %139, %138 : vector<4x1xf32>
    %141 = tpu.reciprocal %140 {approx = true} : vector<4x1xf32> -> vector<4x1xf32>
    %142 = arith.mulf %138, %141 : vector<4x1xf32>
    %cst_48 = arith.constant 9.99999971E-10 : f32
    %143 = vector.broadcast %cst_48 : f32 to vector<4x1xf32>
    %144 = arith.addf %138, %143 : vector<4x1xf32>
    %145 = math.rsqrt %144 : vector<4x1xf32>
    %146 = arith.mulf %142, %145 : vector<4x1xf32>
    %147 = vector.broadcast %146 : vector<4x1xf32> to vector<4x32xf32>
    %148 = arith.mulf %135, %147 : vector<4x32xf32>
    %149 = vector.extract_strided_slice %148 {offsets = [0, 0], sizes = [2, 32], strides = [1, 1]} : vector<4x32xf32> to vector<2x32xf32>
    %150 = vector.extract_strided_slice %148 {offsets = [2, 0], sizes = [2, 32], strides = [1, 1]} : vector<4x32xf32> to vector<2x32xf32>
    %151 = arith.addf %149, %150 : vector<2x32xf32>
    %c0_49 = arith.constant 0 : index
    %c0_50 = arith.constant 0 : index
    %152 = vector.load %arg6[%c0_49, %c0_50] : memref<2x32xf32, #tpu.memory_space<vmem>>, vector<2x32xf32>
    tpu.vector_store %arg6[%c0_49, %c0_50], %151 {strides = array<i32>} : memref<2x32xf32, #tpu.memory_space<vmem>>, vector<2x32xf32>,
    return
  }
}

</mosaic_0001>

<llo_original>
// kernel: simple_classifier_forward.1
$region0: #{simple_classifier_forward.1}
  #allocation0 [shape = 'u32[]', space=smem, size = 0x4, offset = 0x4, fixed_abs, tag = 'smem constant byte address 0x4 - core index']
  #allocation1 [shape = 'u32[144,128]{1,0:T(1,128)}', space=vmem, size = 0x12000, scoped, tag = 'internal scratch']
  %s0 = inlined_call_operand.vmem [shape: f32[2,512], index: 0, kind: input, shape index: {}]
  %s1 = inlined_call_operand.vmem [shape: bf16[512,384], index: 1, kind: input, shape index: {}]
  %s2 = inlined_call_operand.vmem [shape: f32[1,384], index: 2, kind: input, shape index: {}]
  %s3 = inlined_call_operand.vmem [shape: bf16[384,32], index: 3, kind: input, shape index: {}]
  %s4 = inlined_call_operand.vmem [shape: bf16[384,39], index: 4, kind: input, shape index: {}]
  %s5 = inlined_call_operand.vmem [shape: bf16[39,384], index: 5, kind: input, shape index: {}]
  %s6 = inlined_call_operand.vmem [shape: f32[2,32], index: 6, kind: output, shape index: {}]
  %s7 = sld [smem:[#allocation0]]
  $region34: #{simple_classifier_forward.1} parent=0
    _
  %s9 = ssub.s32 1, %s7
  %s10 = scalar_select 0, %s9, %s7
  // Predicated region
  $region2: #{simple_classifier_forward.1} parent=0 // pred_check
    _
  $region3: #{simple_classifier_forward.1} parent=0 // pred_check_branch
    %12 = sbr.rel (0) target = $region5
  $region4: #{simple_classifier_forward.1} parent=0 // pred_region
    _
  $region5: #{simple_classifier_forward.1} parent=0 // pred_fallthru
    _
  // Predicated region
  $region6: #{simple_classifier_forward.1} parent=0 // pred_check
    _
  $region7: #{simple_classifier_forward.1} parent=0 // pred_check_branch
    %14 = sbr.rel (0) target = $region9
  $region8: #{simple_classifier_forward.1} parent=0 // pred_region
    _
  $region9: #{simple_classifier_forward.1} parent=0 // pred_fallthru
    _
  // Predicated region
  $region10: #{simple_classifier_forward.1} parent=0 // pred_check
    _
  $region11: #{simple_classifier_forward.1} parent=0 // pred_check_branch
    %16 = sbr.rel (0) target = $region13
  $region12: #{simple_classifier_forward.1} parent=0 // pred_region
    _
  $region13: #{simple_classifier_forward.1} parent=0 // pred_fallthru
    _
  // Predicated region
  $region14: #{simple_classifier_forward.1} parent=0 // pred_check
    _
  $region15: #{simple_classifier_forward.1} parent=0 // pred_check_branch
    %18 = sbr.rel (0) target = $region17
  $region16: #{simple_classifier_forward.1} parent=0 // pred_region
    _
  $region17: #{simple_classifier_forward.1} parent=0 // pred_fallthru
    _
  // Predicated region
  $region18: #{simple_classifier_forward.1} parent=0 // pred_check
    _
  $region19: #{simple_classifier_forward.1} parent=0 // pred_check_branch
    %20 = sbr.rel (0) target = $region21
  $region20: #{simple_classifier_forward.1} parent=0 // pred_region
    _
  $region21: #{simple_classifier_forward.1} parent=0 // pred_fallthru
    _
  // Predicated region
  $region22: #{simple_classifier_forward.1} parent=0 // pred_check
    _
  $region23: #{simple_classifier_forward.1} parent=0 // pred_check_branch
    %22 = sbr.rel (0) target = $region25
  $region24: #{simple_classifier_forward.1} parent=0 // pred_region
    _
  $region25: #{simple_classifier_forward.1} parent=0 // pred_fallthru
    _
  %v23 = vld [vmem:[%s1] sm:$0xff]
  %v24 = vld [vmem:[%s1 + $0x8] sm:$0xf]
  %v25 = vld [vmem:[%s1 + $0xc] sm:$0xff]
  %v26 = vld [vmem:[%s1 + $0x14] sm:$0xf]
  %v27 = vld [vmem:[%s1 + $0x18] sm:$0xff]
  %v28 = vld [vmem:[%s1 + $0x20] sm:$0xf]
  %v29 = vld [vmem:[%s1 + $0x24] sm:$0xff]
  %v30 = vld [vmem:[%s1 + $0x2c] sm:$0xf]
  %v31 = vld [vmem:[%s1 + $0x30] sm:$0xff]
  %v32 = vld [vmem:[%s1 + $0x38] sm:$0xf]
  %v33 = vld [vmem:[%s1 + $0x3c] sm:$0xff]
  %v34 = vld [vmem:[%s1 + $0x44] sm:$0xf]
  %v35 = vld [vmem:[%s1 + $0x48] sm:$0xff]
  %v36 = vld [vmem:[%s1 + $0x50] sm:$0xf]
  %v37 = vld [vmem:[%s1 + $0x54] sm:$0xff]
  %v38 = vld [vmem:[%s1 + $0x5c] sm:$0xf]
  %v39 = vld [vmem:[%s1 + $0x60] sm:$0xff]
  %v40 = vld [vmem:[%s1 + $0x68] sm:$0xf]
  %v41 = vld [vmem:[%s1 + $0x6c] sm:$0xff]
  %v42 = vld [vmem:[%s1 + $0x74] sm:$0xf]
  %v43 = vld [vmem:[%s1 + $0x78] sm:$0xff]
  %v44 = vld [vmem:[%s1 + $0x80] sm:$0xf]
  %v45 = vld [vmem:[%s1 + $0x84] sm:$0xff]
  %v46 = vld [vmem:[%s1 + $0x8c] sm:$0xf]
  %v47 = vld [vmem:[%s1 + $0x90] sm:$0xff]
  %v48 = vld [vmem:[%s1 + $0x98] sm:$0xf]
  %v49 = vld [vmem:[%s1 + $0x9c] sm:$0xff]
  %v50 = vld [vmem:[%s1 + $0xa4] sm:$0xf]
  %v51 = vld [vmem:[%s1 + $0xa8] sm:$0xff]
  %v52 = vld [vmem:[%s1 + $0xb0] sm:$0xf]
  %v53 = vld [vmem:[%s1 + $0xb4] sm:$0xff]
  %v54 = vld [vmem:[%s1 + $0xbc] sm:$0xf]
  %v55 = vld [vmem:[%s1 + $0xc0] sm:$0xff]
  %v56 = vld [vmem:[%s1 + $0xc8] sm:$0xf]
  %v57 = vld [vmem:[%s1 + $0xcc] sm:$0xff]
  %v58 = vld [vmem:[%s1 + $0xd4] sm:$0xf]
  %v59 = vld [vmem:[%s1 + $0xd8] sm:$0xff]
  %v60 = vld [vmem:[%s1 + $0xe0] sm:$0xf]
  %v61 = vld [vmem:[%s1 + $0xe4] sm:$0xff]
  %v62 = vld [vmem:[%s1 + $0xec] sm:$0xf]
  %v63 = vld [vmem:[%s1 + $0xf0] sm:$0xff]
  %v64 = vld [vmem:[%s1 + $0xf8] sm:$0xf]
  %v65 = vld [vmem:[%s1 + $0xfc] sm:$0xff]
  %v66 = vld [vmem:[%s1 + $0x104] sm:$0xf]
  %v67 = vld [vmem:[%s1 + $0x108] sm:$0xff]
  %v68 = vld [vmem:[%s1 + $0x110] sm:$0xf]
  %v69 = vld [vmem:[%s1 + $0x114] sm:$0xff]
  %v70 = vld [vmem:[%s1 + $0x11c] sm:$0xf]
  %v71 = vld [vmem:[%s1 + $0x120] sm:$0xff]
  %v72 = vld [vmem:[%s1 + $0x128] sm:$0xf]
  %v73 = vld [vmem:[%s1 + $0x12c] sm:$0xff]
  %v74 = vld [vmem:[%s1 + $0x134] sm:$0xf]
  %v75 = vld [vmem:[%s1 + $0x138] sm:$0xff]
  %v76 = vld [vmem:[%s1 + $0x140] sm:$0xf]
  %v77 = vld [vmem:[%s1 + $0x144] sm:$0xff]
  %v78 = vld [vmem:[%s1 + $0x14c] sm:$0xf]
  %v79 = vld [vmem:[%s1 + $0x150] sm:$0xff]
  %v80 = vld [vmem:[%s1 + $0x158] sm:$0xf]
  %v81 = vld [vmem:[%s1 + $0x15c] sm:$0xff]
  %v82 = vld [vmem:[%s1 + $0x164] sm:$0xf]
  %v83 = vld [vmem:[%s1 + $0x168] sm:$0xff]
  %v84 = vld [vmem:[%s1 + $0x170] sm:$0xf]
  %v85 = vld [vmem:[%s1 + $0x174] sm:$0xff]
  %v86 = vld [vmem:[%s1 + $0x17c] sm:$0xf]
  %v87 = vld [vmem:[%s1 + $0x180] sm:$0xff]
  %v88 = vld [vmem:[%s1 + $0x188] sm:$0xf]
  %v89 = vld [vmem:[%s1 + $0x18c] sm:$0xff]
  %v90 = vld [vmem:[%s1 + $0x194] sm:$0xf]
  %v91 = vld [vmem:[%s1 + $0x198] sm:$0xff]
  %v92 = vld [vmem:[%s1 + $0x1a0] sm:$0xf]
  %v93 = vld [vmem:[%s1 + $0x1a4] sm:$0xff]
  %v94 = vld [vmem:[%s1 + $0x1ac] sm:$0xf]
  %v95 = vld [vmem:[%s1 + $0x1b0] sm:$0xff]
  %v96 = vld [vmem:[%s1 + $0x1b8] sm:$0xf]
  %v97 = vld [vmem:[%s1 + $0x1bc] sm:$0xff]
  %v98 = vld [vmem:[%s1 + $0x1c4] sm:$0xf]
  %v99 = vld [vmem:[%s1 + $0x1c8] sm:$0xff]
  %v100 = vld [vmem:[%s1 + $0x1d0] sm:$0xf]
  %v101 = vld [vmem:[%s1 + $0x1d4] sm:$0xff]
  %v102 = vld [vmem:[%s1 + $0x1dc] sm:$0xf]
  %v103 = vld [vmem:[%s1 + $0x1e0] sm:$0xff]
  %v104 = vld [vmem:[%s1 + $0x1e8] sm:$0xf]
  %v105 = vld [vmem:[%s1 + $0x1ec] sm:$0xff]
  %v106 = vld [vmem:[%s1 + $0x1f4] sm:$0xf]
  %v107 = vld [vmem:[%s1 + $0x1f8] sm:$0xff]
  %v108 = vld [vmem:[%s1 + $0x200] sm:$0xf]
  %v109 = vld [vmem:[%s1 + $0x204] sm:$0xff]
  %v110 = vld [vmem:[%s1 + $0x20c] sm:$0xf]
  %v111 = vld [vmem:[%s1 + $0x210] sm:$0xff]
  %v112 = vld [vmem:[%s1 + $0x218] sm:$0xf]
  %v113 = vld [vmem:[%s1 + $0x21c] sm:$0xff]
  %v114 = vld [vmem:[%s1 + $0x224] sm:$0xf]
  %v115 = vld [vmem:[%s1 + $0x228] sm:$0xff]
  %v116 = vld [vmem:[%s1 + $0x230] sm:$0xf]
  %v117 = vld [vmem:[%s1 + $0x234] sm:$0xff]
  %v118 = vld [vmem:[%s1 + $0x23c] sm:$0xf]
  %v119 = vld [vmem:[%s1 + $0x240] sm:$0xff]
  %v120 = vld [vmem:[%s1 + $0x248] sm:$0xf]
  %v121 = vld [vmem:[%s1 + $0x24c] sm:$0xff]
  %v122 = vld [vmem:[%s1 + $0x254] sm:$0xf]
  %v123 = vld [vmem:[%s1 + $0x258] sm:$0xff]
  %v124 = vld [vmem:[%s1 + $0x260] sm:$0xf]
  %v125 = vld [vmem:[%s1 + $0x264] sm:$0xff]
  %v126 = vld [vmem:[%s1 + $0x26c] sm:$0xf]
  %v127 = vld [vmem:[%s1 + $0x270] sm:$0xff]
  %v128 = vld [vmem:[%s1 + $0x278] sm:$0xf]
  %v129 = vld [vmem:[%s1 + $0x27c] sm:$0xff]
  %v130 = vld [vmem:[%s1 + $0x284] sm:$0xf]
  %v131 = vld [vmem:[%s1 + $0x288] sm:$0xff]
  %v132 = vld [vmem:[%s1 + $0x290] sm:$0xf]
  %v133 = vld [vmem:[%s1 + $0x294] sm:$0xff]
  %v134 = vld [vmem:[%s1 + $0x29c] sm:$0xf]
  %v135 = vld [vmem:[%s1 + $0x2a0] sm:$0xff]
  %v136 = vld [vmem:[%s1 + $0x2a8] sm:$0xf]
  %v137 = vld [vmem:[%s1 + $0x2ac] sm:$0xff]
  %v138 = vld [vmem:[%s1 + $0x2b4] sm:$0xf]
  %v139 = vld [vmem:[%s1 + $0x2b8] sm:$0xff]
  %v140 = vld [vmem:[%s1 + $0x2c0] sm:$0xf]
  %v141 = vld [vmem:[%s1 + $0x2c4] sm:$0xff]
  %v142 = vld [vmem:[%s1 + $0x2cc] sm:$0xf]
  %v143 = vld [vmem:[%s1 + $0x2d0] sm:$0xff]
  %v144 = vld [vmem:[%s1 + $0x2d8] sm:$0xf]
  %v145 = vld [vmem:[%s1 + $0x2dc] sm:$0xff]
  %v146 = vld [vmem:[%s1 + $0x2e4] sm:$0xf]
  %v147 = vld [vmem:[%s1 + $0x2e8] sm:$0xff]
  %v148 = vld [vmem:[%s1 + $0x2f0] sm:$0xf]
  %v149 = vld [vmem:[%s1 + $0x2f4] sm:$0xff]
  %v150 = vld [vmem:[%s1 + $0x2fc] sm:$0xf]
  %v151 = vunpack.c.l.bf16 %v23
  %v152 = vunpack.c.h.bf16 %v23
  %v153 = vunpack.c.l.bf16 %v24
  %v154 = vunpack.c.l.bf16 %v25
  %v155 = vunpack.c.h.bf16 %v25
  %v156 = vunpack.c.l.bf16 %v26
  %v157 = vunpack.c.l.bf16 %v27
  %v158 = vunpack.c.h.bf16 %v27
  %v159 = vunpack.c.l.bf16 %v28
  %v160 = vunpack.c.l.bf16 %v29
  %v161 = vunpack.c.h.bf16 %v29
  %v162 = vunpack.c.l.bf16 %v30
  %v163 = vunpack.c.l.bf16 %v31
  %v164 = vunpack.c.h.bf16 %v31
  %v165 = vunpack.c.l.bf16 %v32
  %v166 = vunpack.c.l.bf16 %v33
  %v167 = vunpack.c.h.bf16 %v33
  %v168 = vunpack.c.l.bf16 %v34
  %v169 = vunpack.c.l.bf16 %v35
  %v170 = vunpack.c.h.bf16 %v35
  %v171 = vunpack.c.l.bf16 %v36
  %v172 = vunpack.c.l.bf16 %v37
  %v173 = vunpack.c.h.bf16 %v37
  %v174 = vunpack.c.l.bf16 %v38
  %v175 = vunpack.c.l.bf16 %v39
  %v176 = vunpack.c.h.bf16 %v39
  %v177 = vunpack.c.l.bf16 %v40
  %v178 = vunpack.c.l.bf16 %v41
  %v179 = vunpack.c.h.bf16 %v41
  %v180 = vunpack.c.l.bf16 %v42
  %v181 = vunpack.c.l.bf16 %v43
  %v182 = vunpack.c.h.bf16 %v43
  %v183 = vunpack.c.l.bf16 %v44
  %v184 = vunpack.c.l.bf16 %v45
  %v185 = vunpack.c.h.bf16 %v45
  %v186 = vunpack.c.l.bf16 %v46
  %v187 = vunpack.c.l.bf16 %v47
  %v188 = vunpack.c.h.bf16 %v47
  %v189 = vunpack.c.l.bf16 %v48
  %v190 = vunpack.c.l.bf16 %v49
  %v191 = vunpack.c.h.bf16 %v49
  %v192 = vunpack.c.l.bf16 %v50
  %v193 = vunpack.c.l.bf16 %v51
  %v194 = vunpack.c.h.bf16 %v51
  %v195 = vunpack.c.l.bf16 %v52
  %v196 = vunpack.c.l.bf16 %v53
  %v197 = vunpack.c.h.bf16 %v53
  %v198 = vunpack.c.l.bf16 %v54
  %v199 = vunpack.c.l.bf16 %v55
  %v200 = vunpack.c.h.bf16 %v55
  %v201 = vunpack.c.l.bf16 %v56
  %v202 = vunpack.c.l.bf16 %v57
  %v203 = vunpack.c.h.bf16 %v57
  %v204 = vunpack.c.l.bf16 %v58
  %v205 = vunpack.c.l.bf16 %v59
  %v206 = vunpack.c.h.bf16 %v59
  %v207 = vunpack.c.l.bf16 %v60
  %v208 = vunpack.c.l.bf16 %v61
  %v209 = vunpack.c.h.bf16 %v61
  %v210 = vunpack.c.l.bf16 %v62
  %v211 = vunpack.c.l.bf16 %v63
  %v212 = vunpack.c.h.bf16 %v63
  %v213 = vunpack.c.l.bf16 %v64
  %v214 = vunpack.c.l.bf16 %v65
  %v215 = vunpack.c.h.bf16 %v65
  %v216 = vunpack.c.l.bf16 %v66
  %v217 = vunpack.c.l.bf16 %v67
  %v218 = vunpack.c.h.bf16 %v67
  %v219 = vunpack.c.l.bf16 %v68
  %v220 = vunpack.c.l.bf16 %v69
  %v221 = vunpack.c.h.bf16 %v69
  %v222 = vunpack.c.l.bf16 %v70
  %v223 = vunpack.c.l.bf16 %v71
  %v224 = vunpack.c.h.bf16 %v71
  %v225 = vunpack.c.l.bf16 %v72
  %v226 = vunpack.c.l.bf16 %v73
  %v227 = vunpack.c.h.bf16 %v73
  %v228 = vunpack.c.l.bf16 %v74
  %v229 = vunpack.c.l.bf16 %v75
  %v230 = vunpack.c.h.bf16 %v75
  %v231 = vunpack.c.l.bf16 %v76
  %v232 = vunpack.c.l.bf16 %v77
  %v233 = vunpack.c.h.bf16 %v77
  %v234 = vunpack.c.l.bf16 %v78
  %v235 = vunpack.c.l.bf16 %v79
  %v236 = vunpack.c.h.bf16 %v79
  %v237 = vunpack.c.l.bf16 %v80
  %v238 = vunpack.c.l.bf16 %v81
  %v239 = vunpack.c.h.bf16 %v81
  %v240 = vunpack.c.l.bf16 %v82
  %v241 = vunpack.c.l.bf16 %v83
  %v242 = vunpack.c.h.bf16 %v83
  %v243 = vunpack.c.l.bf16 %v84
  %v244 = vunpack.c.l.bf16 %v85
  %v245 = vunpack.c.h.bf16 %v85
  %v246 = vunpack.c.l.bf16 %v86
  %v247 = vunpack.c.l.bf16 %v87
  %v248 = vunpack.c.h.bf16 %v87
  %v249 = vunpack.c.l.bf16 %v88
  %v250 = vunpack.c.l.bf16 %v89
  %v251 = vunpack.c.h.bf16 %v89
  %v252 = vunpack.c.l.bf16 %v90
  %v253 = vunpack.c.l.bf16 %v91
  %v254 = vunpack.c.h.bf16 %v91
  %v255 = vunpack.c.l.bf16 %v92
  %v256 = vunpack.c.l.bf16 %v93
  %v257 = vunpack.c.h.bf16 %v93
  %v258 = vunpack.c.l.bf16 %v94
  %v259 = vunpack.c.l.bf16 %v95
  %v260 = vunpack.c.h.bf16 %v95
  %v261 = vunpack.c.l.bf16 %v96
  %v262 = vunpack.c.l.bf16 %v97
  %v263 = vunpack.c.h.bf16 %v97
  %v264 = vunpack.c.l.bf16 %v98
  %v265 = vunpack.c.l.bf16 %v99
  %v266 = vunpack.c.h.bf16 %v99
  %v267 = vunpack.c.l.bf16 %v100
  %v268 = vunpack.c.l.bf16 %v101
  %v269 = vunpack.c.h.bf16 %v101
  %v270 = vunpack.c.l.bf16 %v102
  %v271 = vunpack.c.l.bf16 %v103
  %v272 = vunpack.c.h.bf16 %v103
  %v273 = vunpack.c.l.bf16 %v104
  %v274 = vunpack.c.l.bf16 %v105
  %v275 = vunpack.c.h.bf16 %v105
  %v276 = vunpack.c.l.bf16 %v106
  %v277 = vunpack.c.l.bf16 %v107
  %v278 = vunpack.c.h.bf16 %v107
  %v279 = vunpack.c.l.bf16 %v108
  %v280 = vunpack.c.l.bf16 %v109
  %v281 = vunpack.c.h.bf16 %v109
  %v282 = vunpack.c.l.bf16 %v110
  %v283 = vunpack.c.l.bf16 %v111
  %v284 = vunpack.c.h.bf16 %v111
  %v285 = vunpack.c.l.bf16 %v112
  %v286 = vunpack.c.l.bf16 %v113
  %v287 = vunpack.c.h.bf16 %v113
  %v288 = vunpack.c.l.bf16 %v114
  %v289 = vunpack.c.l.bf16 %v115
  %v290 = vunpack.c.h.bf16 %v115
  %v291 = vunpack.c.l.bf16 %v116
  %v292 = vunpack.c.l.bf16 %v117
  %v293 = vunpack.c.h.bf16 %v117
  %v294 = vunpack.c.l.bf16 %v118
  %v295 = vunpack.c.l.bf16 %v119
  %v296 = vunpack.c.h.bf16 %v119
  %v297 = vunpack.c.l.bf16 %v120
  %v298 = vunpack.c.l.bf16 %v121
  %v299 = vunpack.c.h.bf16 %v121
  %v300 = vunpack.c.l.bf16 %v122
  %v301 = vunpack.c.l.bf16 %v123
  %v302 = vunpack.c.h.bf16 %v123
  %v303 = vunpack.c.l.bf16 %v124
  %v304 = vunpack.c.l.bf16 %v125
  %v305 = vunpack.c.h.bf16 %v125
  %v306 = vunpack.c.l.bf16 %v126
  %v307 = vunpack.c.l.bf16 %v127
  %v308 = vunpack.c.h.bf16 %v127
  %v309 = vunpack.c.l.bf16 %v128
  %v310 = vunpack.c.l.bf16 %v129
  %v311 = vunpack.c.h.bf16 %v129
  %v312 = vunpack.c.l.bf16 %v130
  %v313 = vunpack.c.l.bf16 %v131
  %v314 = vunpack.c.h.bf16 %v131
  %v315 = vunpack.c.l.bf16 %v132
  %v316 = vunpack.c.l.bf16 %v133
  %v317 = vunpack.c.h.bf16 %v133
  %v318 = vunpack.c.l.bf16 %v134
  %v319 = vunpack.c.l.bf16 %v135
  %v320 = vunpack.c.h.bf16 %v135
  %v321 = vunpack.c.l.bf16 %v136
  %v322 = vunpack.c.l.bf16 %v137
  %v323 = vunpack.c.h.bf16 %v137
  %v324 = vunpack.c.l.bf16 %v138
  %v325 = vunpack.c.l.bf16 %v139
  %v326 = vunpack.c.h.bf16 %v139
  %v327 = vunpack.c.l.bf16 %v140
  %v328 = vunpack.c.l.bf16 %v141
  %v329 = vunpack.c.h.bf16 %v141
  %v330 = vunpack.c.l.bf16 %v142
  %v331 = vunpack.c.l.bf16 %v143
  %v332 = vunpack.c.h.bf16 %v143
  %v333 = vunpack.c.l.bf16 %v144
  %v334 = vunpack.c.l.bf16 %v145
  %v335 = vunpack.c.h.bf16 %v145
  %v336 = vunpack.c.l.bf16 %v146
  %v337 = vunpack.c.l.bf16 %v147
  %v338 = vunpack.c.h.bf16 %v147
  %v339 = vunpack.c.l.bf16 %v148
  %v340 = vunpack.c.l.bf16 %v149
  %v341 = vunpack.c.h.bf16 %v149
  %v342 = vunpack.c.l.bf16 %v150
  %v343 = vld [vmem:[%s3] sm:$0xf]
  %v344 = vld [vmem:[%s3 + $0x4] sm:$0xf]
  %v345 = vld [vmem:[%s3 + $0x8] sm:$0xf]
  %v346 = vld [vmem:[%s3 + $0xc] sm:$0xf]
  %v347 = vld [vmem:[%s3 + $0x10] sm:$0xf]
  %v348 = vld [vmem:[%s3 + $0x14] sm:$0xf]
  %v349 = vld [vmem:[%s3 + $0x18] sm:$0xf]
  %v350 = vld [vmem:[%s3 + $0x1c] sm:$0xf]
  %v351 = vld [vmem:[%s3 + $0x20] sm:$0xf]
  %v352 = vld [vmem:[%s3 + $0x24] sm:$0xf]
  %v353 = vld [vmem:[%s3 + $0x28] sm:$0xf]
  %v354 = vld [vmem:[%s3 + $0x2c] sm:$0xf]
  %v355 = vld [vmem:[%s3 + $0x30] sm:$0xf]
  %v356 = vld [vmem:[%s3 + $0x34] sm:$0xf]
  %v357 = vld [vmem:[%s3 + $0x38] sm:$0xf]
  %v358 = vld [vmem:[%s3 + $0x3c] sm:$0xf]
  %v359 = vld [vmem:[%s3 + $0x40] sm:$0xf]
  %v360 = vld [vmem:[%s3 + $0x44] sm:$0xf]
  %v361 = vld [vmem:[%s3 + $0x48] sm:$0xf]
  %v362 = vld [vmem:[%s3 + $0x4c] sm:$0xf]
  %v363 = vld [vmem:[%s3 + $0x50] sm:$0xf]
  %v364 = vld [vmem:[%s3 + $0x54] sm:$0xf]
  %v365 = vld [vmem:[%s3 + $0x58] sm:$0xf]
  %v366 = vld [vmem:[%s3 + $0x5c] sm:$0xf]
  %v367 = vld [vmem:[%s3 + $0x60] sm:$0xf]
  %v368 = vld [vmem:[%s3 + $0x64] sm:$0xf]
  %v369 = vld [vmem:[%s3 + $0x68] sm:$0xf]
  %v370 = vld [vmem:[%s3 + $0x6c] sm:$0xf]
  %v371 = vld [vmem:[%s3 + $0x70] sm:$0xf]
  %v372 = vld [vmem:[%s3 + $0x74] sm:$0xf]
  %v373 = vld [vmem:[%s3 + $0x78] sm:$0xf]
  %v374 = vld [vmem:[%s3 + $0x7c] sm:$0xf]
  %v375 = vld [vmem:[%s3 + $0x80] sm:$0xf]
  %v376 = vld [vmem:[%s3 + $0x84] sm:$0xf]
  %v377 = vld [vmem:[%s3 + $0x88] sm:$0xf]
  %v378 = vld [vmem:[%s3 + $0x8c] sm:$0xf]
  %v379 = vld [vmem:[%s3 + $0x90] sm:$0xf]
  %v380 = vld [vmem:[%s3 + $0x94] sm:$0xf]
  %v381 = vld [vmem:[%s3 + $0x98] sm:$0xf]
  %v382 = vld [vmem:[%s3 + $0x9c] sm:$0xf]
  %v383 = vld [vmem:[%s3 + $0xa0] sm:$0xf]
  %v384 = vld [vmem:[%s3 + $0xa4] sm:$0xf]
  %v385 = vld [vmem:[%s3 + $0xa8] sm:$0xf]
  %v386 = vld [vmem:[%s3 + $0xac] sm:$0xf]
  %v387 = vld [vmem:[%s3 + $0xb0] sm:$0xf]
  %v388 = vld [vmem:[%s3 + $0xb4] sm:$0xf]
  %v389 = vld [vmem:[%s3 + $0xb8] sm:$0xf]
  %v390 = vld [vmem:[%s3 + $0xbc] sm:$0xf]
  %v391 = vunpack.c.l.bf16 %v343
  %v392 = vunpack.c.l.bf16 %v344
  %v393 = vunpack.c.l.bf16 %v345
  %v394 = vunpack.c.l.bf16 %v346
  %v395 = vunpack.c.l.bf16 %v347
  %v396 = vunpack.c.l.bf16 %v348
  %v397 = vunpack.c.l.bf16 %v349
  %v398 = vunpack.c.l.bf16 %v350
  %v399 = vunpack.c.l.bf16 %v351
  %v400 = vunpack.c.l.bf16 %v352
  %v401 = vunpack.c.l.bf16 %v353
  %v402 = vunpack.c.l.bf16 %v354
  %v403 = vunpack.c.l.bf16 %v355
  %v404 = vunpack.c.l.bf16 %v356
  %v405 = vunpack.c.l.bf16 %v357
  %v406 = vunpack.c.l.bf16 %v358
  %v407 = vunpack.c.l.bf16 %v359
  %v408 = vunpack.c.l.bf16 %v360
  %v409 = vunpack.c.l.bf16 %v361
  %v410 = vunpack.c.l.bf16 %v362
  %v411 = vunpack.c.l.bf16 %v363
  %v412 = vunpack.c.l.bf16 %v364
  %v413 = vunpack.c.l.bf16 %v365
  %v414 = vunpack.c.l.bf16 %v366
  %v415 = vunpack.c.l.bf16 %v367
  %v416 = vunpack.c.l.bf16 %v368
  %v417 = vunpack.c.l.bf16 %v369
  %v418 = vunpack.c.l.bf16 %v370
  %v419 = vunpack.c.l.bf16 %v371
  %v420 = vunpack.c.l.bf16 %v372
  %v421 = vunpack.c.l.bf16 %v373
  %v422 = vunpack.c.l.bf16 %v374
  %v423 = vunpack.c.l.bf16 %v375
  %v424 = vunpack.c.l.bf16 %v376
  %v425 = vunpack.c.l.bf16 %v377
  %v426 = vunpack.c.l.bf16 %v378
  %v427 = vunpack.c.l.bf16 %v379
  %v428 = vunpack.c.l.bf16 %v380
  %v429 = vunpack.c.l.bf16 %v381
  %v430 = vunpack.c.l.bf16 %v382
  %v431 = vunpack.c.l.bf16 %v383
  %v432 = vunpack.c.l.bf16 %v384
  %v433 = vunpack.c.l.bf16 %v385
  %v434 = vunpack.c.l.bf16 %v386
  %v435 = vunpack.c.l.bf16 %v387
  %v436 = vunpack.c.l.bf16 %v388
  %v437 = vunpack.c.l.bf16 %v389
  %v438 = vunpack.c.l.bf16 %v390
  %v439 = vld [vmem:[%s4] sm:$0xf]
  %v440 = vld [vmem:[%s4 + $0x4] sm:$0xf]
  %v441 = vld [vmem:[%s4 + $0x8] sm:$0xf]
  %v442 = vld [vmem:[%s4 + $0xc] sm:$0xf]
  %v443 = vld [vmem:[%s4 + $0x10] sm:$0xf]
  %v444 = vld [vmem:[%s4 + $0x14] sm:$0xf]
  %v445 = vld [vmem:[%s4 + $0x18] sm:$0xf]
  %v446 = vld [vmem:[%s4 + $0x1c] sm:$0xf]
  %v447 = vld [vmem:[%s4 + $0x20] sm:$0xf]
  %v448 = vld [vmem:[%s4 + $0x24] sm:$0xf]
  %v449 = vld [vmem:[%s4 + $0x28] sm:$0xf]
  %v450 = vld [vmem:[%s4 + $0x2c] sm:$0xf]
  %v451 = vld [vmem:[%s4 + $0x30] sm:$0xf]
  %v452 = vld [vmem:[%s4 + $0x34] sm:$0xf]
  %v453 = vld [vmem:[%s4 + $0x38] sm:$0xf]
  %v454 = vld [vmem:[%s4 + $0x3c] sm:$0xf]
  %v455 = vld [vmem:[%s4 + $0x40] sm:$0xf]
  %v456 = vld [vmem:[%s4 + $0x44] sm:$0xf]
  %v457 = vld [vmem:[%s4 + $0x48] sm:$0xf]
  %v458 = vld [vmem:[%s4 + $0x4c] sm:$0xf]
  %v459 = vld [vmem:[%s4 + $0x50] sm:$0xf]
  %v460 = vld [vmem:[%s4 + $0x54] sm:$0xf]
  %v461 = vld [vmem:[%s4 + $0x58] sm:$0xf]
  %v462 = vld [vmem:[%s4 + $0x5c] sm:$0xf]
  %v463 = vld [vmem:[%s4 + $0x60] sm:$0xf]
  %v464 = vld [vmem:[%s4 + $0x64] sm:$0xf]
  %v465 = vld [vmem:[%s4 + $0x68] sm:$0xf]
  %v466 = vld [vmem:[%s4 + $0x6c] sm:$0xf]
  %v467 = vld [vmem:[%s4 + $0x70] sm:$0xf]
  %v468 = vld [vmem:[%s4 + $0x74] sm:$0xf]
  %v469 = vld [vmem:[%s4 + $0x78] sm:$0xf]
  %v470 = vld [vmem:[%s4 + $0x7c] sm:$0xf]
  %v471 = vld [vmem:[%s4 + $0x80] sm:$0xf]
  %v472 = vld [vmem:[%s4 + $0x84] sm:$0xf]
  %v473 = vld [vmem:[%s4 + $0x88] sm:$0xf]
  %v474 = vld [vmem:[%s4 + $0x8c] sm:$0xf]
  %v475 = vld [vmem:[%s4 + $0x90] sm:$0xf]
  %v476 = vld [vmem:[%s4 + $0x94] sm:$0xf]
  %v477 = vld [vmem:[%s4 + $0x98] sm:$0xf]
  %v478 = vld [vmem:[%s4 + $0x9c] sm:$0xf]
  %v479 = vld [vmem:[%s4 + $0xa0] sm:$0xf]
  %v480 = vld [vmem:[%s4 + $0xa4] sm:$0xf]
  %v481 = vld [vmem:[%s4 + $0xa8] sm:$0xf]
  %v482 = vld [vmem:[%s4 + $0xac] sm:$0xf]
  %v483 = vld [vmem:[%s4 + $0xb0] sm:$0xf]
  %v484 = vld [vmem:[%s4 + $0xb4] sm:$0xf]
  %v485 = vld [vmem:[%s4 + $0xb8] sm:$0xf]
  %v486 = vld [vmem:[%s4 + $0xbc] sm:$0xf]
  %v487 = vunpack.c.l.bf16 %v439
  %v488 = vunpack.c.l.bf16 %v440
  %v489 = vunpack.c.l.bf16 %v441
  %v490 = vunpack.c.l.bf16 %v442
  %v491 = vunpack.c.l.bf16 %v443
  %v492 = vunpack.c.l.bf16 %v444
  %v493 = vunpack.c.l.bf16 %v445
  %v494 = vunpack.c.l.bf16 %v446
  %v495 = vunpack.c.l.bf16 %v447
  %v496 = vunpack.c.l.bf16 %v448
  %v497 = vunpack.c.l.bf16 %v449
  %v498 = vunpack.c.l.bf16 %v450
  %v499 = vunpack.c.l.bf16 %v451
  %v500 = vunpack.c.l.bf16 %v452
  %v501 = vunpack.c.l.bf16 %v453
  %v502 = vunpack.c.l.bf16 %v454
  %v503 = vunpack.c.l.bf16 %v455
  %v504 = vunpack.c.l.bf16 %v456
  %v505 = vunpack.c.l.bf16 %v457
  %v506 = vunpack.c.l.bf16 %v458
  %v507 = vunpack.c.l.bf16 %v459
  %v508 = vunpack.c.l.bf16 %v460
  %v509 = vunpack.c.l.bf16 %v461
  %v510 = vunpack.c.l.bf16 %v462
  %v511 = vunpack.c.l.bf16 %v463
  %v512 = vunpack.c.l.bf16 %v464
  %v513 = vunpack.c.l.bf16 %v465
  %v514 = vunpack.c.l.bf16 %v466
  %v515 = vunpack.c.l.bf16 %v467
  %v516 = vunpack.c.l.bf16 %v468
  %v517 = vunpack.c.l.bf16 %v469
  %v518 = vunpack.c.l.bf16 %v470
  %v519 = vunpack.c.l.bf16 %v471
  %v520 = vunpack.c.l.bf16 %v472
  %v521 = vunpack.c.l.bf16 %v473
  %v522 = vunpack.c.l.bf16 %v474
  %v523 = vunpack.c.l.bf16 %v475
  %v524 = vunpack.c.l.bf16 %v476
  %v525 = vunpack.c.l.bf16 %v477
  %v526 = vunpack.c.l.bf16 %v478
  %v527 = vunpack.c.l.bf16 %v479
  %v528 = vunpack.c.l.bf16 %v480
  %v529 = vunpack.c.l.bf16 %v481
  %v530 = vunpack.c.l.bf16 %v482
  %v531 = vunpack.c.l.bf16 %v483
  %v532 = vunpack.c.l.bf16 %v484
  %v533 = vunpack.c.l.bf16 %v485
  %v534 = vunpack.c.l.bf16 %v486
  %v535 = vld [vmem:[%s5] sm:$0xff]
  %v536 = vld [vmem:[%s5 + $0x8] sm:$0xf]
  %v537 = vld [vmem:[%s5 + $0xc] sm:$0xff]
  %v538 = vld [vmem:[%s5 + $0x14] sm:$0xf]
  %v539 = vld [vmem:[%s5 + $0x18] sm:$0xff]
  %v540 = vld [vmem:[%s5 + $0x20] sm:$0xf]
  %v541 = vld [vmem:[%s5 + $0x24] sm:$0xff]
  %v542 = vld [vmem:[%s5 + $0x2c] sm:$0xf]
  %v543 = vld [vmem:[%s5 + $0x30] sm:$0xff]
  %v544 = vld [vmem:[%s5 + $0x38] sm:$0xf]
  %v545 = vunpack.c.l.bf16 %v535
  %v546 = vunpack.c.h.bf16 %v535
  %v547 = vunpack.c.l.bf16 %v536
  %v548 = vunpack.c.l.bf16 %v537
  %v549 = vunpack.c.h.bf16 %v537
  %v550 = vunpack.c.l.bf16 %v538
  %v551 = vunpack.c.l.bf16 %v539
  %v552 = vunpack.c.h.bf16 %v539
  %v553 = vunpack.c.l.bf16 %v540
  %v554 = vunpack.c.l.bf16 %v541
  %v555 = vunpack.c.h.bf16 %v541
  %v556 = vunpack.c.l.bf16 %v542
  %v557 = vunpack.c.l.bf16 %v543
  %v558 = vunpack.c.h.bf16 %v543
  %v559 = vunpack.c.l.bf16 %v544
  %v560 = vlaneseq
  %v561 = vshrl.u32 %v560, 7
  %v562 = vlaneseq
  %v563 = vand.u32 %v562, 127
  %vm564 = vcmp.lt.s32.totalorder %v561, 2
  %vm565 = vcmp.lt.s32.totalorder %v563, 16
  %vm566 = vmxor %vm564, %vm565
  %vm567 = vmxor %vm566, 1
  %v568 = vsel %vm567, 1.0, 0.0
  %v569 = vld [vmem:[%s0] sm:$0xff]
  %v570 = vld [vmem:[%s2] sm:$0x7]
  %v572 = vlaneseq
  %v573 = vshrl.u32 %v572, 7
  %v574 = vsub.s32 0, %v573
  %v575 = vrot.slane %v570, %v574
  %v576 = vlaneseq
  %v577 = vshrl.u32 %v576, 7
  %v578 = vsub.s32 1, %v577
  %v579 = vrot.slane %v570, %v578
  %v580 = vlaneseq
  %v581 = vshrl.u32 %v580, 7
  %v582 = vsub.s32 2, %v581
  %v583 = vrot.slane %v570, %v582
  %v588 = vcombine.high %v569, %v569
  %v590 = vunpack.c.l.s4 1983009808
  %v591 = vunpack.c.0.s8 %v590
  %v592 = vlaneseq
  %v593 = vshrl.u32 %v592, 7
  %v594 = vsub.s32 %v591, %v593
  %v595 = vrot.slane %v569, %v594
  %v597 = vunpack.c.l.s4 1983009808
  %v598 = vunpack.c.0.s8 %v597
  %v599 = vlaneseq
  %v600 = vshrl.u32 %v599, 7
  %v601 = vsub.s32 %v598, %v600
  %v602 = vrot.slane %v588, %v601
  %v603 = vcombine.high %v595, %v595
  %v604 = vcombine.high %v602, %v602
  %609 = vmatprep.subr.mxu0 %v152
  %610 = vmatpush1.msra.mxu0 %v151
  %611 = vmatprep.subr.mxu0 %v155
  %612 = vmatpush1.msra.mxu0 %v154
  %613 = vmatprep.subr.mxu0 %v158
  %614 = vmatpush1.msra.mxu0 %v157
  %615 = vmatprep.subr.mxu0 %v161
  %616 = vmatpush1.msra.mxu0 %v160
  %617 = vmatprep.subr.mxu0 %v164
  %618 = vmatpush1.msra.mxu0 %v163
  %619 = vmatprep.subr.mxu0 %v167
  %620 = vmatpush1.msra.mxu0 %v166
  %621 = vmatprep.subr.mxu0 %v170
  %622 = vmatpush1.msra.mxu0 %v169
  %623 = vmatprep.subr.mxu0 %v173
  %624 = vmatpush1.msra.mxu0 %v172
  %625 = vmatprep.subr.mxu0 %v176
  %626 = vmatpush1.msra.mxu0 %v175
  %627 = vmatprep.subr.mxu0 %v179
  %628 = vmatpush1.msra.mxu0 %v178
  %629 = vmatprep.subr.mxu0 %v182
  %630 = vmatpush1.msra.mxu0 %v181
  %631 = vmatprep.subr.mxu0 %v185
  %632 = vmatpush1.msra.mxu0 %v184
  %633 = vmatprep.subr.mxu0 %v188
  %634 = vmatpush1.msra.mxu0 %v187
  %635 = vmatprep.subr.mxu0 %v191
  %636 = vmatpush1.msra.mxu0 %v190
  %637 = vmatprep.subr.mxu0 %v194
  %638 = vmatpush1.msra.mxu0 %v193
  %639 = vmatprep.subr.mxu0 %v197
  %640 = vmatpush1.msra.mxu0 %v196
  %641 = vmatprep.subr.mxu0 %v200
  %642 = vmatpush1.msra.mxu0 %v199
  %643 = vmatprep.subr.mxu0 %v203
  %644 = vmatpush1.msra.mxu0 %v202
  %645 = vmatprep.subr.mxu0 %v206
  %646 = vmatpush1.msra.mxu0 %v205
  %647 = vmatprep.subr.mxu0 %v209
  %648 = vmatpush1.msra.mxu0 %v208
  %649 = vmatprep.subr.mxu0 %v212
  %650 = vmatpush1.msra.mxu0 %v211
  %651 = vmatprep.subr.mxu0 %v215
  %652 = vmatpush1.msra.mxu0 %v214
  %653 = vmatprep.subr.mxu0 %v218
  %654 = vmatpush1.msra.mxu0 %v217
  %655 = vmatprep.subr.mxu0 %v221
  %656 = vmatpush1.msra.mxu0 %v220
  %657 = vmatprep.subr.mxu0 %v224
  %658 = vmatpush1.msra.mxu0 %v223
  %659 = vmatprep.subr.mxu0 %v227
  %660 = vmatpush1.msra.mxu0 %v226
  %661 = vmatprep.subr.mxu0 %v230
  %662 = vmatpush1.msra.mxu0 %v229
  %663 = vmatprep.subr.mxu0 %v233
  %664 = vmatpush1.msra.mxu0 %v232
  %665 = vmatprep.subr.mxu0 %v236
  %666 = vmatpush1.msra.mxu0 %v235
  %667 = vmatprep.subr.mxu0 %v239
  %668 = vmatpush1.msra.mxu0 %v238
  %669 = vmatprep.subr.mxu0 %v242
  %670 = vmatpush1.msra.mxu0 %v241
  %671 = vmatprep.subr.mxu0 %v245
  %672 = vmatpush1.msra.mxu0 %v244
  %673 = vmatprep.mubr.f32.mxu0 %v603
  %674 = vmatmul.mubr.f32.gmra.mrb[0].mxu0 %v595
  %v675 = vpop.f32.mrb[0].mxu0
  %v676 = vadd.f32 %v575, %v675
  %v677 = vpop.f32.mrb[0].mxu0
  %v678 = vadd.f32 %v579, %v677
  %679 = vdwg.mxu0
  %680 = vmatprep.subr.mxu0 %v248
  %681 = vmatpush1.msra.mxu0 %v247
  %682 = vmatprep.subr.mxu0 %v251
  %683 = vmatpush1.msra.mxu0 %v250
  %684 = vmatprep.subr.mxu0 %v254
  %685 = vmatpush1.msra.mxu0 %v253
  %686 = vmatprep.subr.mxu0 %v257
  %687 = vmatpush1.msra.mxu0 %v256
  %688 = vmatprep.subr.mxu0 %v260
  %689 = vmatpush1.msra.mxu0 %v259
  %690 = vmatprep.subr.mxu0 %v263
  %691 = vmatpush1.msra.mxu0 %v262
  %692 = vmatprep.subr.mxu0 %v266
  %693 = vmatpush1.msra.mxu0 %v265
  %694 = vmatprep.subr.mxu0 %v269
  %695 = vmatpush1.msra.mxu0 %v268
  %696 = vmatprep.subr.mxu0 %v272
  %697 = vmatpush1.msra.mxu0 %v271
  %698 = vmatprep.subr.mxu0 %v275
  %699 = vmatpush1.msra.mxu0 %v274
  %700 = vmatprep.subr.mxu0 %v278
  %701 = vmatpush1.msra.mxu0 %v277
  %702 = vmatprep.subr.mxu0 %v281
  %703 = vmatpush1.msra.mxu0 %v280
  %704 = vmatprep.subr.mxu0 %v284
  %705 = vmatpush1.msra.mxu0 %v283
  %706 = vmatprep.subr.mxu0 %v287
  %707 = vmatpush1.msra.mxu0 %v286
  %708 = vmatprep.subr.mxu0 %v290
  %709 = vmatpush1.msra.mxu0 %v289
  %710 = vmatprep.subr.mxu0 %v293
  %711 = vmatpush1.msra.mxu0 %v292
  %712 = vmatprep.subr.mxu0 %v296
  %713 = vmatpush1.msra.mxu0 %v295
  %714 = vmatprep.subr.mxu0 %v299
  %715 = vmatpush1.msra.mxu0 %v298
  %716 = vmatprep.subr.mxu0 %v302
  %717 = vmatpush1.msra.mxu0 %v301
  %718 = vmatprep.subr.mxu0 %v305
  %719 = vmatpush1.msra.mxu0 %v304
  %720 = vmatprep.subr.mxu0 %v308
  %721 = vmatpush1.msra.mxu0 %v307
  %722 = vmatprep.subr.mxu0 %v311
  %723 = vmatpush1.msra.mxu0 %v310
  %724 = vmatprep.subr.mxu0 %v314
  %725 = vmatpush1.msra.mxu0 %v313
  %726 = vmatprep.subr.mxu0 %v317
  %727 = vmatpush1.msra.mxu0 %v316
  %728 = vmatprep.subr.mxu0 %v320
  %729 = vmatpush1.msra.mxu0 %v319
  %730 = vmatprep.subr.mxu0 %v323
  %731 = vmatpush1.msra.mxu0 %v322
  %732 = vmatprep.subr.mxu0 %v326
  %733 = vmatpush1.msra.mxu0 %v325
  %734 = vmatprep.subr.mxu0 %v329
  %735 = vmatpush1.msra.mxu0 %v328
  %736 = vmatprep.subr.mxu0 %v332
  %737 = vmatpush1.msra.mxu0 %v331
  %738 = vmatprep.subr.mxu0 %v335
  %739 = vmatpush1.msra.mxu0 %v334
  %740 = vmatprep.subr.mxu0 %v338
  %741 = vmatpush1.msra.mxu0 %v337
  %742 = vmatprep.subr.mxu0 %v341
  %743 = vmatpush1.msra.mxu0 %v340
  %744 = vmatprep.mubr.f32.mxu0 %v604
  %745 = vmatmul.mubr.f32.gmra.mrb[0].mxu0 %v602
  %v746 = vpop.f32.mrb[0].mxu0
  %v747 = vadd.f32 %v676, %v746
  %v748 = vpop.f32.mrb[0].mxu0
  %v749 = vadd.f32 %v678, %v748
  %750 = vdwg.mxu0
  %751 = vmatprep.subr.mxu0 0.0
  %752 = vmatpush1.msra.mxu0 %v153
  %753 = vmatprep.subr.mxu0 0.0
  %754 = vmatpush1.msra.mxu0 %v156
  %755 = vmatprep.subr.mxu0 0.0
  %756 = vmatpush1.msra.mxu0 %v159
  %757 = vmatprep.subr.mxu0 0.0
  %758 = vmatpush1.msra.mxu0 %v162
  %759 = vmatprep.subr.mxu0 0.0
  %760 = vmatpush1.msra.mxu0 %v165
  %761 = vmatprep.subr.mxu0 0.0
  %762 = vmatpush1.msra.mxu0 %v168
  %763 = vmatprep.subr.mxu0 0.0
  %764 = vmatpush1.msra.mxu0 %v171
  %765 = vmatprep.subr.mxu0 0.0
  %766 = vmatpush1.msra.mxu0 %v174
  %767 = vmatprep.subr.mxu0 0.0
  %768 = vmatpush1.msra.mxu0 %v177
  %769 = vmatprep.subr.mxu0 0.0
  %770 = vmatpush1.msra.mxu0 %v180
  %771 = vmatprep.subr.mxu0 0.0
  %772 = vmatpush1.msra.mxu0 %v183
  %773 = vmatprep.subr.mxu0 0.0
  %774 = vmatpush1.msra.mxu0 %v186
  %775 = vmatprep.subr.mxu0 0.0
  %776 = vmatpush1.msra.mxu0 %v189
  %777 = vmatprep.subr.mxu0 0.0
  %778 = vmatpush1.msra.mxu0 %v192
  %779 = vmatprep.subr.mxu0 0.0
  %780 = vmatpush1.msra.mxu0 %v195
  %781 = vmatprep.subr.mxu0 0.0
  %782 = vmatpush1.msra.mxu0 %v198
  %783 = vmatprep.subr.mxu0 0.0
  %784 = vmatpush1.msra.mxu0 %v201
  %785 = vmatprep.subr.mxu0 0.0
  %786 = vmatpush1.msra.mxu0 %v204
  %787 = vmatprep.subr.mxu0 0.0
  %788 = vmatpush1.msra.mxu0 %v207
  %789 = vmatprep.subr.mxu0 0.0
  %790 = vmatpush1.msra.mxu0 %v210
  %791 = vmatprep.subr.mxu0 0.0
  %792 = vmatpush1.msra.mxu0 %v213
  %793 = vmatprep.subr.mxu0 0.0
  %794 = vmatpush1.msra.mxu0 %v216
  %795 = vmatprep.subr.mxu0 0.0
  %796 = vmatpush1.msra.mxu0 %v219
  %797 = vmatprep.subr.mxu0 0.0
  %798 = vmatpush1.msra.mxu0 %v222
  %799 = vmatprep.subr.mxu0 0.0
  %800 = vmatpush1.msra.mxu0 %v225
  %801 = vmatprep.subr.mxu0 0.0
  %802 = vmatpush1.msra.mxu0 %v228
  %803 = vmatprep.subr.mxu0 0.0
  %804 = vmatpush1.msra.mxu0 %v231
  %805 = vmatprep.subr.mxu0 0.0
  %806 = vmatpush1.msra.mxu0 %v234
  %807 = vmatprep.subr.mxu0 0.0
  %808 = vmatpush1.msra.mxu0 %v237
  %809 = vmatprep.subr.mxu0 0.0
  %810 = vmatpush1.msra.mxu0 %v240
  %811 = vmatprep.subr.mxu0 0.0
  %812 = vmatpush1.msra.mxu0 %v243
  %813 = vmatprep.subr.mxu0 0.0
  %814 = vmatpush1.msra.mxu0 %v246
  %815 = vmatprep.mubr.f32.mxu0 %v603
  %816 = vmatmul.mubr.f32.gmra.mrb[0].mxu0 %v595
  %v817 = vpop.f32.mrb[0].mxu0
  %v818 = vadd.f32 %v583, %v817
  %v819 = vpop.f32.mrb[0].mxu0
  %820 = vdwg.mxu0
  %821 = vmatprep.subr.mxu0 0.0
  %822 = vmatpush1.msra.mxu0 %v249
  %823 = vmatprep.subr.mxu0 0.0
  %824 = vmatpush1.msra.mxu0 %v252
  %825 = vmatprep.subr.mxu0 0.0
  %826 = vmatpush1.msra.mxu0 %v255
  %827 = vmatprep.subr.mxu0 0.0
  %828 = vmatpush1.msra.mxu0 %v258
  %829 = vmatprep.subr.mxu0 0.0
  %830 = vmatpush1.msra.mxu0 %v261
  %831 = vmatprep.subr.mxu0 0.0
  %832 = vmatpush1.msra.mxu0 %v264
  %833 = vmatprep.subr.mxu0 0.0
  %834 = vmatpush1.msra.mxu0 %v267
  %835 = vmatprep.subr.mxu0 0.0
  %836 = vmatpush1.msra.mxu0 %v270
  %837 = vmatprep.subr.mxu0 0.0
  %838 = vmatpush1.msra.mxu0 %v273
  %839 = vmatprep.subr.mxu0 0.0
  %840 = vmatpush1.msra.mxu0 %v276
  %841 = vmatprep.subr.mxu0 0.0
  %842 = vmatpush1.msra.mxu0 %v279
  %843 = vmatprep.subr.mxu0 0.0
  %844 = vmatpush1.msra.mxu0 %v282
  %845 = vmatprep.subr.mxu0 0.0
  %846 = vmatpush1.msra.mxu0 %v285
  %847 = vmatprep.subr.mxu0 0.0
  %848 = vmatpush1.msra.mxu0 %v288
  %849 = vmatprep.subr.mxu0 0.0
  %850 = vmatpush1.msra.mxu0 %v291
  %851 = vmatprep.subr.mxu0 0.0
  %852 = vmatpush1.msra.mxu0 %v294
  %853 = vmatprep.subr.mxu0 0.0
  %854 = vmatpush1.msra.mxu0 %v297
  %855 = vmatprep.subr.mxu0 0.0
  %856 = vmatpush1.msra.mxu0 %v300
  %857 = vmatprep.subr.mxu0 0.0
  %858 = vmatpush1.msra.mxu0 %v303
  %859 = vmatprep.subr.mxu0 0.0
  %860 = vmatpush1.msra.mxu0 %v306
  %861 = vmatprep.subr.mxu0 0.0
  %862 = vmatpush1.msra.mxu0 %v309
  %863 = vmatprep.subr.mxu0 0.0
  %864 = vmatpush1.msra.mxu0 %v312
  %865 = vmatprep.subr.mxu0 0.0
  %866 = vmatpush1.msra.mxu0 %v315
  %867 = vmatprep.subr.mxu0 0.0
  %868 = vmatpush1.msra.mxu0 %v318
  %869 = vmatprep.subr.mxu0 0.0
  %870 = vmatpush1.msra.mxu0 %v321
  %871 = vmatprep.subr.mxu0 0.0
  %872 = vmatpush1.msra.mxu0 %v324
  %873 = vmatprep.subr.mxu0 0.0
  %874 = vmatpush1.msra.mxu0 %v327
  %875 = vmatprep.subr.mxu0 0.0
  %876 = vmatpush1.msra.mxu0 %v330
  %877 = vmatprep.subr.mxu0 0.0
  %878 = vmatpush1.msra.mxu0 %v333
  %879 = vmatprep.subr.mxu0 0.0
  %880 = vmatpush1.msra.mxu0 %v336
  %881 = vmatprep.subr.mxu0 0.0
  %882 = vmatpush1.msra.mxu0 %v339
  %883 = vmatprep.subr.mxu0 0.0
  %884 = vmatpush1.msra.mxu0 %v342
  %885 = vmatprep.mubr.f32.mxu0 %v604
  %886 = vmatmul.mubr.f32.gmra.mrb[0].mxu0 %v602
  %v887 = vpop.f32.mrb[0].mxu0
  %v888 = vadd.f32 %v818, %v887
  %v889 = vpop.f32.mrb[0].mxu0
  %890 = vdwg.mxu0
  %v891 = vmul.f32 %v747, %v747
  %v892 = vmul.f32 %v749, %v749
  %v893 = vmul.f32 %v888, %v888
  %894 = vmatprep.subr.mxu0 0.0
  %895 = vmatpush1.msra.mxu0 %v487
  %896 = vmatprep.subr.mxu0 0.0
  %897 = vmatpush1.msra.mxu0 %v488
  %898 = vmatprep.subr.mxu0 0.0
  %899 = vmatpush1.msra.mxu0 %v489
  %900 = vmatprep.subr.mxu0 0.0
  %901 = vmatpush1.msra.mxu0 %v490
  %902 = vmatprep.subr.mxu0 0.0
  %903 = vmatpush1.msra.mxu0 %v491
  %904 = vmatprep.subr.mxu0 0.0
  %905 = vmatpush1.msra.mxu0 %v492
  %906 = vmatprep.subr.mxu0 0.0
  %907 = vmatpush1.msra.mxu0 %v493
  %908 = vmatprep.subr.mxu0 0.0
  %909 = vmatpush1.msra.mxu0 %v494
  %910 = vmatprep.subr.mxu0 0.0
  %911 = vmatpush1.msra.mxu0 %v495
  %912 = vmatprep.subr.mxu0 0.0
  %913 = vmatpush1.msra.mxu0 %v496
  %914 = vmatprep.subr.mxu0 0.0
  %915 = vmatpush1.msra.mxu0 %v497
  %916 = vmatprep.subr.mxu0 0.0
  %917 = vmatpush1.msra.mxu0 %v498
  %918 = vmatprep.subr.mxu0 0.0
  %919 = vmatpush1.msra.mxu0 %v499
  %920 = vmatprep.subr.mxu0 0.0
  %921 = vmatpush1.msra.mxu0 %v500
  %922 = vmatprep.subr.mxu0 0.0
  %923 = vmatpush1.msra.mxu0 %v501
  %924 = vmatprep.subr.mxu0 0.0
  %925 = vmatpush1.msra.mxu0 %v502
  %926 = vmatprep.subr.mxu0 0.0
  %927 = vmatpush1.msra.mxu0 %v503
  %928 = vmatprep.subr.mxu0 0.0
  %929 = vmatpush1.msra.mxu0 %v504
  %930 = vmatprep.subr.mxu0 0.0
  %931 = vmatpush1.msra.mxu0 %v505
  %932 = vmatprep.subr.mxu0 0.0
  %933 = vmatpush1.msra.mxu0 %v506
  %934 = vmatprep.subr.mxu0 0.0
  %935 = vmatpush1.msra.mxu0 %v507
  %936 = vmatprep.subr.mxu0 0.0
  %937 = vmatpush1.msra.mxu0 %v508
  %938 = vmatprep.subr.mxu0 0.0
  %939 = vmatpush1.msra.mxu0 %v509
  %940 = vmatprep.subr.mxu0 0.0
  %941 = vmatpush1.msra.mxu0 %v510
  %942 = vmatprep.subr.mxu0 0.0
  %943 = vmatpush1.msra.mxu0 %v511
  %944 = vmatprep.subr.mxu0 0.0
  %945 = vmatpush1.msra.mxu0 %v512
  %946 = vmatprep.subr.mxu0 0.0
  %947 = vmatpush1.msra.mxu0 %v513
  %948 = vmatprep.subr.mxu0 0.0
  %949 = vmatpush1.msra.mxu0 %v514
  %950 = vmatprep.subr.mxu0 0.0
  %951 = vmatpush1.msra.mxu0 %v515
  %952 = vmatprep.subr.mxu0 0.0
  %953 = vmatpush1.msra.mxu0 %v516
  %954 = vmatprep.subr.mxu0 0.0
  %955 = vmatpush1.msra.mxu0 %v517
  %956 = vmatprep.subr.mxu0 0.0
  %957 = vmatpush1.msra.mxu0 %v518
  %958 = vmatprep.mubr.f32.mxu0 %v892
  %959 = vmatmul.mubr.f32.gmra.mrb[0].mxu0 %v891
  %v960 = vpop.f32.mrb[0].mxu0
  %v961 = vadd.f32 0.0, %v960
  %v962 = vpop.f32.mrb[0].mxu0
  %963 = vdwg.mxu0
  %964 = vmatprep.subr.mxu0 0.0
  %965 = vmatpush1.msra.mxu0 %v519
  %966 = vmatprep.subr.mxu0 0.0
  %967 = vmatpush1.msra.mxu0 %v520
  %968 = vmatprep.subr.mxu0 0.0
  %969 = vmatpush1.msra.mxu0 %v521
  %970 = vmatprep.subr.mxu0 0.0
  %971 = vmatpush1.msra.mxu0 %v522
  %972 = vmatprep.subr.mxu0 0.0
  %973 = vmatpush1.msra.mxu0 %v523
  %974 = vmatprep.subr.mxu0 0.0
  %975 = vmatpush1.msra.mxu0 %v524
  %976 = vmatprep.subr.mxu0 0.0
  %977 = vmatpush1.msra.mxu0 %v525
  %978 = vmatprep.subr.mxu0 0.0
  %979 = vmatpush1.msra.mxu0 %v526
  %980 = vmatprep.subr.mxu0 0.0
  %981 = vmatpush1.msra.mxu0 %v527
  %982 = vmatprep.subr.mxu0 0.0
  %983 = vmatpush1.msra.mxu0 %v528
  %984 = vmatprep.subr.mxu0 0.0
  %985 = vmatpush1.msra.mxu0 %v529
  %986 = vmatprep.subr.mxu0 0.0
  %987 = vmatpush1.msra.mxu0 %v530
  %988 = vmatprep.subr.mxu0 0.0
  %989 = vmatpush1.msra.mxu0 %v531
  %990 = vmatprep.subr.mxu0 0.0
  %991 = vmatpush1.msra.mxu0 %v532
  %992 = vmatprep.subr.mxu0 0.0
  %993 = vmatpush1.msra.mxu0 %v533
  %994 = vmatprep.subr.mxu0 0.0
  %995 = vmatpush1.msra.mxu0 %v534
  %996 = vmatprep.subr.mxu0 0.0
  %997 = vmatpush1.msra.mxu0 0.0
  %998 = vmatprep.subr.mxu0 0.0
  %999 = vmatpush1.msra.mxu0 0.0
  %1000 = vmatprep.subr.mxu0 0.0
  %1001 = vmatpush1.msra.mxu0 0.0
  %1002 = vmatprep.subr.mxu0 0.0
  %1003 = vmatpush1.msra.mxu0 0.0
  %1004 = vmatprep.subr.mxu0 0.0
  %1005 = vmatpush1.msra.mxu0 0.0
  %1006 = vmatprep.subr.mxu0 0.0
  %1007 = vmatpush1.msra.mxu0 0.0
  %1008 = vmatprep.subr.mxu0 0.0
  %1009 = vmatpush1.msra.mxu0 0.0
  %1010 = vmatprep.subr.mxu0 0.0
  %1011 = vmatpush1.msra.mxu0 0.0
  %1012 = vmatprep.subr.mxu0 0.0
  %1013 = vmatpush1.msra.mxu0 0.0
  %1014 = vmatprep.subr.mxu0 0.0
  %1015 = vmatpush1.msra.mxu0 0.0
  %1016 = vmatprep.subr.mxu0 0.0
  %1017 = vmatpush1.msra.mxu0 0.0
  %1018 = vmatprep.subr.mxu0 0.0
  %1019 = vmatpush1.msra.mxu0 0.0
  %1020 = vmatprep.subr.mxu0 0.0
  %1021 = vmatpush1.msra.mxu0 0.0
  %1022 = vmatprep.subr.mxu0 0.0
  %1023 = vmatpush1.msra.mxu0 0.0
  %1024 = vmatprep.subr.mxu0 0.0
  %1025 = vmatpush1.msra.mxu0 0.0
  %1026 = vmatprep.subr.mxu0 0.0
  %1027 = vmatpush1.msra.mxu0 0.0
  %1028 = vmatprep.mubr.f32.mxu0 0.0
  %1029 = vmatmul.mubr.f32.gmra.mrb[0].mxu0 %v893
  %v1030 = vpop.f32.mrb[0].mxu0
  %v1031 = vadd.f32 %v961, %v1030
  %v1032 = vpop.f32.mrb[0].mxu0
  %1033 = vdwg.mxu0
  %v1034 = vadd.f32 %v1031, 1.0
  %v1035 = vrcp.pop %v1034
  %v1036 = vmul.f32 %v1031, %v1035
  %v1037 = vadd.f32 %v1031, 1e-09
  %v1038 = vrsqrt.pop %v1037
  %v1039 = vmul.f32 %v1036, %v1038
  %vm1040 = vcmask 318464
  %v1042 = vsel %vm1040, %v1039, 0
  %vm1044 = vcmask 1046528
  %v1046 = vsel %vm1044, %v557, 0
  %v1049 = vsel %vm1044, %v558, 0
  %v1052 = vsel %vm1044, %v559, 0
  %1054 = vmatprep.subr.mxu0 %v546
  %1055 = vmatpush1.msra.mxu0 %v545
  %1056 = vmatprep.subr.mxu0 %v549
  %1057 = vmatpush1.msra.mxu0 %v548
  %1058 = vmatprep.subr.mxu0 %v552
  %1059 = vmatpush1.msra.mxu0 %v551
  %1060 = vmatprep.subr.mxu0 %v555
  %1061 = vmatpush1.msra.mxu0 %v554
  %1062 = vmatprep.subr.mxu0 %v1049
  %1063 = vmatpush1.msra.mxu0 %v1046
  %1064 = vmatprep.subr.mxu0 0.0
  %1065 = vmatpush1.msra.mxu0 0.0
  %1066 = vmatprep.subr.mxu0 0.0
  %1067 = vmatpush1.msra.mxu0 0.0
  %1068 = vmatprep.subr.mxu0 0.0
  %1069 = vmatpush1.msra.mxu0 0.0
  %1070 = vmatprep.subr.mxu0 0.0
  %1071 = vmatpush1.msra.mxu0 0.0
  %1072 = vmatprep.subr.mxu0 0.0
  %1073 = vmatpush1.msra.mxu0 0.0
  %1074 = vmatprep.subr.mxu0 0.0
  %1075 = vmatpush1.msra.mxu0 0.0
  %1076 = vmatprep.subr.mxu0 0.0
  %1077 = vmatpush1.msra.mxu0 0.0
  %1078 = vmatprep.subr.mxu0 0.0
  %1079 = vmatpush1.msra.mxu0 0.0
  %1080 = vmatprep.subr.mxu0 0.0
  %1081 = vmatpush1.msra.mxu0 0.0
  %1082 = vmatprep.subr.mxu0 0.0
  %1083 = vmatpush1.msra.mxu0 0.0
  %1084 = vmatprep.subr.mxu0 0.0
  %1085 = vmatpush1.msra.mxu0 0.0
  %1086 = vmatprep.subr.mxu0 0.0
  %1087 = vmatpush1.msra.mxu0 0.0
  %1088 = vmatprep.subr.mxu0 0.0
  %1089 = vmatpush1.msra.mxu0 0.0
  %1090 = vmatprep.subr.mxu0 0.0
  %1091 = vmatpush1.msra.mxu0 0.0
  %1092 = vmatprep.subr.mxu0 0.0
  %1093 = vmatpush1.msra.mxu0 0.0
  %1094 = vmatprep.subr.mxu0 0.0
  %1095 = vmatpush1.msra.mxu0 0.0
  %1096 = vmatprep.subr.mxu0 0.0
  %1097 = vmatpush1.msra.mxu0 0.0
  %1098 = vmatprep.subr.mxu0 0.0
  %1099 = vmatpush1.msra.mxu0 0.0
  %1100 = vmatprep.subr.mxu0 0.0
  %1101 = vmatpush1.msra.mxu0 0.0
  %1102 = vmatprep.subr.mxu0 0.0
  %1103 = vmatpush1.msra.mxu0 0.0
  %1104 = vmatprep.subr.mxu0 0.0
  %1105 = vmatpush1.msra.mxu0 0.0
  %1106 = vmatprep.subr.mxu0 0.0
  %1107 = vmatpush1.msra.mxu0 0.0
  %1108 = vmatprep.subr.mxu0 0.0
  %1109 = vmatpush1.msra.mxu0 0.0
  %1110 = vmatprep.subr.mxu0 0.0
  %1111 = vmatpush1.msra.mxu0 0.0
  %1112 = vmatprep.subr.mxu0 0.0
  %1113 = vmatpush1.msra.mxu0 0.0
  %1114 = vmatprep.subr.mxu0 0.0
  %1115 = vmatpush1.msra.mxu0 0.0
  %1116 = vmatprep.subr.mxu0 0.0
  %1117 = vmatpush1.msra.mxu0 0.0
  %1118 = vmatprep.mubr.f32.mxu0 0.0
  %1119 = vmatmul.mubr.f32.gmra.mrb[0].mxu0 %v1042
  %v1120 = vpop.f32.mrb[0].mxu0
  %v1121 = vadd.f32 0.0, %v1120
  %v1122 = vpop.f32.mrb[0].mxu0
  %v1123 = vadd.f32 0.0, %v1122
  %1124 = vdwg.mxu0
  %1125 = vmatprep.subr.mxu0 0.0
  %1126 = vmatpush1.msra.mxu0 %v547
  %1127 = vmatprep.subr.mxu0 0.0
  %1128 = vmatpush1.msra.mxu0 %v550
  %1129 = vmatprep.subr.mxu0 0.0
  %1130 = vmatpush1.msra.mxu0 %v553
  %1131 = vmatprep.subr.mxu0 0.0
  %1132 = vmatpush1.msra.mxu0 %v556
  %1133 = vmatprep.subr.mxu0 0.0
  %1134 = vmatpush1.msra.mxu0 %v1052
  %1135 = vmatprep.subr.mxu0 0.0
  %1136 = vmatpush1.msra.mxu0 0.0
  %1137 = vmatprep.subr.mxu0 0.0
  %1138 = vmatpush1.msra.mxu0 0.0
  %1139 = vmatprep.subr.mxu0 0.0
  %1140 = vmatpush1.msra.mxu0 0.0
  %1141 = vmatprep.subr.mxu0 0.0
  %1142 = vmatpush1.msra.mxu0 0.0
  %1143 = vmatprep.subr.mxu0 0.0
  %1144 = vmatpush1.msra.mxu0 0.0
  %1145 = vmatprep.subr.mxu0 0.0
  %1146 = vmatpush1.msra.mxu0 0.0
  %1147 = vmatprep.subr.mxu0 0.0
  %1148 = vmatpush1.msra.mxu0 0.0
  %1149 = vmatprep.subr.mxu0 0.0
  %1150 = vmatpush1.msra.mxu0 0.0
  %1151 = vmatprep.subr.mxu0 0.0
  %1152 = vmatpush1.msra.mxu0 0.0
  %1153 = vmatprep.subr.mxu0 0.0
  %1154 = vmatpush1.msra.mxu0 0.0
  %1155 = vmatprep.subr.mxu0 0.0
  %1156 = vmatpush1.msra.mxu0 0.0
  %1157 = vmatprep.subr.mxu0 0.0
  %1158 = vmatpush1.msra.mxu0 0.0
  %1159 = vmatprep.subr.mxu0 0.0
  %1160 = vmatpush1.msra.mxu0 0.0
  %1161 = vmatprep.subr.mxu0 0.0
  %1162 = vmatpush1.msra.mxu0 0.0
  %1163 = vmatprep.subr.mxu0 0.0
  %1164 = vmatpush1.msra.mxu0 0.0
  %1165 = vmatprep.subr.mxu0 0.0
  %1166 = vmatpush1.msra.mxu0 0.0
  %1167 = vmatprep.subr.mxu0 0.0
  %1168 = vmatpush1.msra.mxu0 0.0
  %1169 = vmatprep.subr.mxu0 0.0
  %1170 = vmatpush1.msra.mxu0 0.0
  %1171 = vmatprep.subr.mxu0 0.0
  %1172 = vmatpush1.msra.mxu0 0.0
  %1173 = vmatprep.subr.mxu0 0.0
  %1174 = vmatpush1.msra.mxu0 0.0
  %1175 = vmatprep.subr.mxu0 0.0
  %1176 = vmatpush1.msra.mxu0 0.0
  %1177 = vmatprep.subr.mxu0 0.0
  %1178 = vmatpush1.msra.mxu0 0.0
  %1179 = vmatprep.subr.mxu0 0.0
  %1180 = vmatpush1.msra.mxu0 0.0
  %1181 = vmatprep.subr.mxu0 0.0
  %1182 = vmatpush1.msra.mxu0 0.0
  %1183 = vmatprep.subr.mxu0 0.0
  %1184 = vmatpush1.msra.mxu0 0.0
  %1185 = vmatprep.subr.mxu0 0.0
  %1186 = vmatpush1.msra.mxu0 0.0
  %1187 = vmatprep.subr.mxu0 0.0
  %1188 = vmatpush1.msra.mxu0 0.0
  %1189 = vmatprep.mubr.f32.mxu0 0.0
  %1190 = vmatmul.mubr.f32.gmra.mrb[0].mxu0 %v1042
  %v1191 = vpop.f32.mrb[0].mxu0
  %v1192 = vadd.f32 0.0, %v1191
  %v1193 = vpop.f32.mrb[0].mxu0
  %1194 = vdwg.mxu0
  %v1195 = vmul.f32 %v747, %v1121
  %v1196 = vmul.f32 %v749, %v1123
  %v1197 = vmul.f32 %v888, %v1192
  %v1201 = vrot.slane %v1195, 6
  %v1202 = vrot.slane %v1196, 6
  %v1203 = vrot.slane %v1197, 6
  %vm1207 = vcmask 1041408
  %v1208 = vsel %vm1207, %v1195, %v1201
  %v1209 = vsel %vm1207, %v1196, %v1202
  %v1210 = vsel %vm1207, %v1197, %v1203
  %v1211 = vmul.f32 %v1208, 0.5
  %v1212 = vmul.f32 %v1209, 0.5
  %v1213 = vmul.f32 %v1210, 0.5
  %1214 = vmatprep.subr.mxu0 0.0
  %1215 = vmatpush1.msra.mxu0 %v391
  %1216 = vmatprep.subr.mxu0 0.0
  %1217 = vmatpush1.msra.mxu0 %v392
  %1218 = vmatprep.subr.mxu0 0.0
  %1219 = vmatpush1.msra.mxu0 %v393
  %1220 = vmatprep.subr.mxu0 0.0
  %1221 = vmatpush1.msra.mxu0 %v394
  %1222 = vmatprep.subr.mxu0 0.0
  %1223 = vmatpush1.msra.mxu0 %v395
  %1224 = vmatprep.subr.mxu0 0.0
  %1225 = vmatpush1.msra.mxu0 %v396
  %1226 = vmatprep.subr.mxu0 0.0
  %1227 = vmatpush1.msra.mxu0 %v397
  %1228 = vmatprep.subr.mxu0 0.0
  %1229 = vmatpush1.msra.mxu0 %v398
  %1230 = vmatprep.subr.mxu0 0.0
  %1231 = vmatpush1.msra.mxu0 %v399
  %1232 = vmatprep.subr.mxu0 0.0
  %1233 = vmatpush1.msra.mxu0 %v400
  %1234 = vmatprep.subr.mxu0 0.0
  %1235 = vmatpush1.msra.mxu0 %v401
  %1236 = vmatprep.subr.mxu0 0.0
  %1237 = vmatpush1.msra.mxu0 %v402
  %1238 = vmatprep.subr.mxu0 0.0
  %1239 = vmatpush1.msra.mxu0 %v403
  %1240 = vmatprep.subr.mxu0 0.0
  %1241 = vmatpush1.msra.mxu0 %v404
  %1242 = vmatprep.subr.mxu0 0.0
  %1243 = vmatpush1.msra.mxu0 %v405
  %1244 = vmatprep.subr.mxu0 0.0
  %1245 = vmatpush1.msra.mxu0 %v406
  %1246 = vmatprep.subr.mxu0 0.0
  %1247 = vmatpush1.msra.mxu0 %v407
  %1248 = vmatprep.subr.mxu0 0.0
  %1249 = vmatpush1.msra.mxu0 %v408
  %1250 = vmatprep.subr.mxu0 0.0
  %1251 = vmatpush1.msra.mxu0 %v409
  %1252 = vmatprep.subr.mxu0 0.0
  %1253 = vmatpush1.msra.mxu0 %v410
  %1254 = vmatprep.subr.mxu0 0.0
  %1255 = vmatpush1.msra.mxu0 %v411
  %1256 = vmatprep.subr.mxu0 0.0
  %1257 = vmatpush1.msra.mxu0 %v412
  %1258 = vmatprep.subr.mxu0 0.0
  %1259 = vmatpush1.msra.mxu0 %v413
  %1260 = vmatprep.subr.mxu0 0.0
  %1261 = vmatpush1.msra.mxu0 %v414
  %1262 = vmatprep.subr.mxu0 0.0
  %1263 = vmatpush1.msra.mxu0 %v415
  %1264 = vmatprep.subr.mxu0 0.0
  %1265 = vmatpush1.msra.mxu0 %v416
  %1266 = vmatprep.subr.mxu0 0.0
  %1267 = vmatpush1.msra.mxu0 %v417
  %1268 = vmatprep.subr.mxu0 0.0
  %1269 = vmatpush1.msra.mxu0 %v418
  %1270 = vmatprep.subr.mxu0 0.0
  %1271 = vmatpush1.msra.mxu0 %v419
  %1272 = vmatprep.subr.mxu0 0.0
  %1273 = vmatpush1.msra.mxu0 %v420
  %1274 = vmatprep.subr.mxu0 0.0
  %1275 = vmatpush1.msra.mxu0 %v421
  %1276 = vmatprep.subr.mxu0 0.0
  %1277 = vmatpush1.msra.mxu0 %v422
  %1278 = vmatprep.mubr.f32.mxu0 %v1212
  %1279 = vmatmul.mubr.f32.gmra.mrb[0].mxu0 %v1211
  %v1280 = vpop.f32.mrb[0].mxu0
  %v1281 = vadd.f32 0.0, %v1280
  %v1282 = vpop.f32.mrb[0].mxu0
  %1283 = vdwg.mxu0
  %1284 = vmatprep.subr.mxu0 0.0
  %1285 = vmatpush1.msra.mxu0 %v423
  %1286 = vmatprep.subr.mxu0 0.0
  %1287 = vmatpush1.msra.mxu0 %v424
  %1288 = vmatprep.subr.mxu0 0.0
  %1289 = vmatpush1.msra.mxu0 %v425
  %1290 = vmatprep.subr.mxu0 0.0
  %1291 = vmatpush1.msra.mxu0 %v426
  %1292 = vmatprep.subr.mxu0 0.0
  %1293 = vmatpush1.msra.mxu0 %v427
  %1294 = vmatprep.subr.mxu0 0.0
  %1295 = vmatpush1.msra.mxu0 %v428
  %1296 = vmatprep.subr.mxu0 0.0
  %1297 = vmatpush1.msra.mxu0 %v429
  %1298 = vmatprep.subr.mxu0 0.0
  %1299 = vmatpush1.msra.mxu0 %v430
  %1300 = vmatprep.subr.mxu0 0.0
  %1301 = vmatpush1.msra.mxu0 %v431
  %1302 = vmatprep.subr.mxu0 0.0
  %1303 = vmatpush1.msra.mxu0 %v432
  %1304 = vmatprep.subr.mxu0 0.0
  %1305 = vmatpush1.msra.mxu0 %v433
  %1306 = vmatprep.subr.mxu0 0.0
  %1307 = vmatpush1.msra.mxu0 %v434
  %1308 = vmatprep.subr.mxu0 0.0
  %1309 = vmatpush1.msra.mxu0 %v435
  %1310 = vmatprep.subr.mxu0 0.0
  %1311 = vmatpush1.msra.mxu0 %v436
  %1312 = vmatprep.subr.mxu0 0.0
  %1313 = vmatpush1.msra.mxu0 %v437
  %1314 = vmatprep.subr.mxu0 0.0
  %1315 = vmatpush1.msra.mxu0 %v438
  %1316 = vmatprep.subr.mxu0 0.0
  %1317 = vmatpush1.msra.mxu0 0.0
  %1318 = vmatprep.subr.mxu0 0.0
  %1319 = vmatpush1.msra.mxu0 0.0
  %1320 = vmatprep.subr.mxu0 0.0
  %1321 = vmatpush1.msra.mxu0 0.0
  %1322 = vmatprep.subr.mxu0 0.0
  %1323 = vmatpush1.msra.mxu0 0.0
  %1324 = vmatprep.subr.mxu0 0.0
  %1325 = vmatpush1.msra.mxu0 0.0
  %1326 = vmatprep.subr.mxu0 0.0
  %1327 = vmatpush1.msra.mxu0 0.0
  %1328 = vmatprep.subr.mxu0 0.0
  %1329 = vmatpush1.msra.mxu0 0.0
  %1330 = vmatprep.subr.mxu0 0.0
  %1331 = vmatpush1.msra.mxu0 0.0
  %1332 = vmatprep.subr.mxu0 0.0
  %1333 = vmatpush1.msra.mxu0 0.0
  %1334 = vmatprep.subr.mxu0 0.0
  %1335 = vmatpush1.msra.mxu0 0.0
  %1336 = vmatprep.subr.mxu0 0.0
  %1337 = vmatpush1.msra.mxu0 0.0
  %1338 = vmatprep.subr.mxu0 0.0
  %1339 = vmatpush1.msra.mxu0 0.0
  %1340 = vmatprep.subr.mxu0 0.0
  %1341 = vmatpush1.msra.mxu0 0.0
  %1342 = vmatprep.subr.mxu0 0.0
  %1343 = vmatpush1.msra.mxu0 0.0
  %1344 = vmatprep.subr.mxu0 0.0
  %1345 = vmatpush1.msra.mxu0 0.0
  %1346 = vmatprep.subr.mxu0 0.0
  %1347 = vmatpush1.msra.mxu0 0.0
  %1348 = vmatprep.mubr.f32.mxu0 0.0
  %1349 = vmatmul.mubr.f32.gmra.mrb[0].mxu0 %v1213
  %v1350 = vpop.f32.mrb[0].mxu0
  %v1351 = vadd.f32 %v1281, %v1350
  %v1352 = vpop.f32.mrb[0].mxu0
  %1353 = vdwg.mxu0
  %v1354 = vmul.f32 %v1351, %v568
  %v1355 = vmul.f32 %v1354, %v1354
  %vm1356 = vcmask 257024
  %v1357 = vsel %vm1356, %v1355, 0.0
  %1358 = vadd.xlane.f32.xlu0 %v1357
  %v1359 = vpop.xlane.xlu0 %1358
  %v1360 = vadd.f32 %v1359, 1.0
  %v1361 = vrcp.pop %v1360
  %v1362 = vmul.f32 %v1359, %v1361
  %v1363 = vadd.f32 %v1359, 1e-09
  %v1364 = vrsqrt.pop %v1363
  %v1365 = vmul.f32 %v1362, %v1364
  %v1366 = vmul.f32 %v1354, %v1365
  %vm1367 = vcmask 261120
  %v1369 = vsel %vm1367, %v1366, 0
  %v1372 = vsel %vm1367, %v391, 0
  %v1375 = vsel %vm1367, %v392, 0
  %v1378 = vsel %vm1367, %v393, 0
  %v1381 = vsel %vm1367, %v394, 0
  %v1384 = vsel %vm1367, %v395, 0
  %v1387 = vsel %vm1367, %v396, 0
  %v1390 = vsel %vm1367, %v397, 0
  %v1393 = vsel %vm1367, %v398, 0
  %v1396 = vsel %vm1367, %v399, 0
  %v1399 = vsel %vm1367, %v400, 0
  %v1402 = vsel %vm1367, %v401, 0
  %v1405 = vsel %vm1367, %v402, 0
  %v1408 = vsel %vm1367, %v403, 0
  %v1411 = vsel %vm1367, %v404, 0
  %v1414 = vsel %vm1367, %v405, 0
  %v1417 = vsel %vm1367, %v406, 0
  %v1420 = vsel %vm1367, %v407, 0
  %v1423 = vsel %vm1367, %v408, 0
  %v1426 = vsel %vm1367, %v409, 0
  %v1429 = vsel %vm1367, %v410, 0
  %v1432 = vsel %vm1367, %v411, 0
  %v1435 = vsel %vm1367, %v412, 0
  %v1438 = vsel %vm1367, %v413, 0
  %v1441 = vsel %vm1367, %v414, 0
  %v1444 = vsel %vm1367, %v415, 0
  %v1447 = vsel %vm1367, %v416, 0
  %v1450 = vsel %vm1367, %v417, 0
  %v1453 = vsel %vm1367, %v418, 0
  %v1456 = vsel %vm1367, %v419, 0
  %v1459 = vsel %vm1367, %v420, 0
  %v1462 = vsel %vm1367, %v421, 0
  %v1465 = vsel %vm1367, %v422, 0
  %v1468 = vsel %vm1367, %v423, 0
  %v1471 = vsel %vm1367, %v424, 0
  %v1474 = vsel %vm1367, %v425, 0
  %v1477 = vsel %vm1367, %v426, 0
  %v1480 = vsel %vm1367, %v427, 0
  %v1483 = vsel %vm1367, %v428, 0
  %v1486 = vsel %vm1367, %v429, 0
  %v1489 = vsel %vm1367, %v430, 0
  %v1492 = vsel %vm1367, %v431, 0
  %v1495 = vsel %vm1367, %v432, 0
  %v1498 = vsel %vm1367, %v433, 0
  %v1501 = vsel %vm1367, %v434, 0
  %v1504 = vsel %vm1367, %v435, 0
  %v1507 = vsel %vm1367, %v436, 0
  %v1510 = vsel %vm1367, %v437, 0
  %v1513 = vsel %vm1367, %v438, 0
  %1515 = vmatprep.subr.mxu0 0.0
  %1516 = vmatpush1.xpose.msra.mxu0 %v1372
  %1517 = vmatprep.subr.mxu0 0.0
  %1518 = vmatpush1.xpose.msra.mxu0 %v1375
  %1519 = vmatprep.subr.mxu0 0.0
  %1520 = vmatpush1.xpose.msra.mxu0 %v1378
  %1521 = vmatprep.subr.mxu0 0.0
  %1522 = vmatpush1.xpose.msra.mxu0 %v1381
  %1523 = vmatprep.subr.mxu0 0.0
  %1524 = vmatpush1.xpose.msra.mxu0 %v1384
  %1525 = vmatprep.subr.mxu0 0.0
  %1526 = vmatpush1.xpose.msra.mxu0 %v1387
  %1527 = vmatprep.subr.mxu0 0.0
  %1528 = vmatpush1.xpose.msra.mxu0 %v1390
  %1529 = vmatprep.subr.mxu0 0.0
  %1530 = vmatpush1.xpose.msra.mxu0 %v1393
  %1531 = vmatprep.subr.mxu0 0.0
  %1532 = vmatpush1.xpose.msra.mxu0 %v1396
  %1533 = vmatprep.subr.mxu0 0.0
  %1534 = vmatpush1.xpose.msra.mxu0 %v1399
  %1535 = vmatprep.subr.mxu0 0.0
  %1536 = vmatpush1.xpose.msra.mxu0 %v1402
  %1537 = vmatprep.subr.mxu0 0.0
  %1538 = vmatpush1.xpose.msra.mxu0 %v1405
  %1539 = vmatprep.subr.mxu0 0.0
  %1540 = vmatpush1.xpose.msra.mxu0 %v1408
  %1541 = vmatprep.subr.mxu0 0.0
  %1542 = vmatpush1.xpose.msra.mxu0 %v1411
  %1543 = vmatprep.subr.mxu0 0.0
  %1544 = vmatpush1.xpose.msra.mxu0 %v1414
  %1545 = vmatprep.subr.mxu0 0.0
  %1546 = vmatpush1.xpose.msra.mxu0 %v1417
  %1547 = vmatprep.subr.mxu0 0.0
  %1548 = vmatpush1.xpose.msra.mxu0 %v1420
  %1549 = vmatprep.subr.mxu0 0.0
  %1550 = vmatpush1.xpose.msra.mxu0 %v1423
  %1551 = vmatprep.subr.mxu0 0.0
  %1552 = vmatpush1.xpose.msra.mxu0 %v1426
  %1553 = vmatprep.subr.mxu0 0.0
  %1554 = vmatpush1.xpose.msra.mxu0 %v1429
  %1555 = vmatprep.subr.mxu0 0.0
  %1556 = vmatpush1.xpose.msra.mxu0 %v1432
  %1557 = vmatprep.subr.mxu0 0.0
  %1558 = vmatpush1.xpose.msra.mxu0 %v1435
  %1559 = vmatprep.subr.mxu0 0.0
  %1560 = vmatpush1.xpose.msra.mxu0 %v1438
  %1561 = vmatprep.subr.mxu0 0.0
  %1562 = vmatpush1.xpose.msra.mxu0 %v1441
  %1563 = vmatprep.subr.mxu0 0.0
  %1564 = vmatpush1.xpose.msra.mxu0 %v1444
  %1565 = vmatprep.subr.mxu0 0.0
  %1566 = vmatpush1.xpose.msra.mxu0 %v1447
  %1567 = vmatprep.subr.mxu0 0.0
  %1568 = vmatpush1.xpose.msra.mxu0 %v1450
  %1569 = vmatprep.subr.mxu0 0.0
  %1570 = vmatpush1.xpose.msra.mxu0 %v1453
  %1571 = vmatprep.subr.mxu0 0.0
  %1572 = vmatpush1.xpose.msra.mxu0 %v1456
  %1573 = vmatprep.subr.mxu0 0.0
  %1574 = vmatpush1.xpose.msra.mxu0 %v1459
  %1575 = vmatprep.subr.mxu0 0.0
  %1576 = vmatpush1.xpose.msra.mxu0 %v1462
  %1577 = vmatprep.subr.mxu0 0.0
  %1578 = vmatpush1.xpose.msra.mxu0 %v1465
  %1579 = vmatprep.mubr.f32.mxu0 0.0
  %1580 = vmatmul.mubr.f32.gmra.mrb[0].mxu0 %v1369
  %v1581 = vpop.f32.mrb[0].mxu0
  %v1582 = vadd.f32 0.0, %v1581
  %v1583 = vpop.f32.mrb[0].mxu0
  %v1584 = vadd.f32 0.0, %v1583
  %1585 = vdwg.mxu0
  %1586 = vmatprep.subr.mxu0 0.0
  %1587 = vmatpush1.xpose.msra.mxu0 %v1468
  %1588 = vmatprep.subr.mxu0 0.0
  %1589 = vmatpush1.xpose.msra.mxu0 %v1471
  %1590 = vmatprep.subr.mxu0 0.0
  %1591 = vmatpush1.xpose.msra.mxu0 %v1474
  %1592 = vmatprep.subr.mxu0 0.0
  %1593 = vmatpush1.xpose.msra.mxu0 %v1477
  %1594 = vmatprep.subr.mxu0 0.0
  %1595 = vmatpush1.xpose.msra.mxu0 %v1480
  %1596 = vmatprep.subr.mxu0 0.0
  %1597 = vmatpush1.xpose.msra.mxu0 %v1483
  %1598 = vmatprep.subr.mxu0 0.0
  %1599 = vmatpush1.xpose.msra.mxu0 %v1486
  %1600 = vmatprep.subr.mxu0 0.0
  %1601 = vmatpush1.xpose.msra.mxu0 %v1489
  %1602 = vmatprep.subr.mxu0 0.0
  %1603 = vmatpush1.xpose.msra.mxu0 %v1492
  %1604 = vmatprep.subr.mxu0 0.0
  %1605 = vmatpush1.xpose.msra.mxu0 %v1495
  %1606 = vmatprep.subr.mxu0 0.0
  %1607 = vmatpush1.xpose.msra.mxu0 %v1498
  %1608 = vmatprep.subr.mxu0 0.0
  %1609 = vmatpush1.xpose.msra.mxu0 %v1501
  %1610 = vmatprep.subr.mxu0 0.0
  %1611 = vmatpush1.xpose.msra.mxu0 %v1504
  %1612 = vmatprep.subr.mxu0 0.0
  %1613 = vmatpush1.xpose.msra.mxu0 %v1507
  %1614 = vmatprep.subr.mxu0 0.0
  %1615 = vmatpush1.xpose.msra.mxu0 %v1510
  %1616 = vmatprep.subr.mxu0 0.0
  %1617 = vmatpush1.xpose.msra.mxu0 %v1513
  %1618 = vmatprep.subr.mxu0 0.0
  %1619 = vmatpush1.xpose.msra.mxu0 0.0
  %1620 = vmatprep.subr.mxu0 0.0
  %1621 = vmatpush1.xpose.msra.mxu0 0.0
  %1622 = vmatprep.subr.mxu0 0.0
  %1623 = vmatpush1.xpose.msra.mxu0 0.0
  %1624 = vmatprep.subr.mxu0 0.0
  %1625 = vmatpush1.xpose.msra.mxu0 0.0
  %1626 = vmatprep.subr.mxu0 0.0
  %1627 = vmatpush1.xpose.msra.mxu0 0.0
  %1628 = vmatprep.subr.mxu0 0.0
  %1629 = vmatpush1.xpose.msra.mxu0 0.0
  %1630 = vmatprep.subr.mxu0 0.0
  %1631 = vmatpush1.xpose.msra.mxu0 0.0
  %1632 = vmatprep.subr.mxu0 0.0
  %1633 = vmatpush1.xpose.msra.mxu0 0.0
  %1634 = vmatprep.subr.mxu0 0.0
  %1635 = vmatpush1.xpose.msra.mxu0 0.0
  %1636 = vmatprep.subr.mxu0 0.0
  %1637 = vmatpush1.xpose.msra.mxu0 0.0
  %1638 = vmatprep.subr.mxu0 0.0
  %1639 = vmatpush1.xpose.msra.mxu0 0.0
  %1640 = vmatprep.subr.mxu0 0.0
  %1641 = vmatpush1.xpose.msra.mxu0 0.0
  %1642 = vmatprep.subr.mxu0 0.0
  %1643 = vmatpush1.xpose.msra.mxu0 0.0
  %1644 = vmatprep.subr.mxu0 0.0
  %1645 = vmatpush1.xpose.msra.mxu0 0.0
  %1646 = vmatprep.subr.mxu0 0.0
  %1647 = vmatpush1.xpose.msra.mxu0 0.0
  %1648 = vmatprep.subr.mxu0 0.0
  %1649 = vmatpush1.xpose.msra.mxu0 0.0
  %1650 = vmatprep.mubr.f32.mxu0 0.0
  %1651 = vmatmul.mubr.f32.gmra.mrb[0].mxu0 %v1369
  %v1652 = vpop.f32.mrb[0].mxu0
  %v1653 = vadd.f32 0.0, %v1652
  %v1654 = vpop.f32.mrb[0].mxu0
  %1655 = vdwg.mxu0
  %v1656 = vmul.f32 %v1208, %v1582
  %v1657 = vmul.f32 %v1209, %v1584
  %v1658 = vmul.f32 %v1210, %v1653
  %1659 = vmatprep.subr.mxu0 0.0
  %1660 = vmatpush1.msra.mxu0 %v487
  %1661 = vmatprep.subr.mxu0 0.0
  %1662 = vmatpush1.msra.mxu0 %v488
  %1663 = vmatprep.subr.mxu0 0.0
  %1664 = vmatpush1.msra.mxu0 %v489
  %1665 = vmatprep.subr.mxu0 0.0
  %1666 = vmatpush1.msra.mxu0 %v490
  %1667 = vmatprep.subr.mxu0 0.0
  %1668 = vmatpush1.msra.mxu0 %v491
  %1669 = vmatprep.subr.mxu0 0.0
  %1670 = vmatpush1.msra.mxu0 %v492
  %1671 = vmatprep.subr.mxu0 0.0
  %1672 = vmatpush1.msra.mxu0 %v493
  %1673 = vmatprep.subr.mxu0 0.0
  %1674 = vmatpush1.msra.mxu0 %v494
  %1675 = vmatprep.subr.mxu0 0.0
  %1676 = vmatpush1.msra.mxu0 %v495
  %1677 = vmatprep.subr.mxu0 0.0
  %1678 = vmatpush1.msra.mxu0 %v496
  %1679 = vmatprep.subr.mxu0 0.0
  %1680 = vmatpush1.msra.mxu0 %v497
  %1681 = vmatprep.subr.mxu0 0.0
  %1682 = vmatpush1.msra.mxu0 %v498
  %1683 = vmatprep.subr.mxu0 0.0
  %1684 = vmatpush1.msra.mxu0 %v499
  %1685 = vmatprep.subr.mxu0 0.0
  %1686 = vmatpush1.msra.mxu0 %v500
  %1687 = vmatprep.subr.mxu0 0.0
  %1688 = vmatpush1.msra.mxu0 %v501
  %1689 = vmatprep.subr.mxu0 0.0
  %1690 = vmatpush1.msra.mxu0 %v502
  %1691 = vmatprep.subr.mxu0 0.0
  %1692 = vmatpush1.msra.mxu0 %v503
  %1693 = vmatprep.subr.mxu0 0.0
  %1694 = vmatpush1.msra.mxu0 %v504
  %1695 = vmatprep.subr.mxu0 0.0
  %1696 = vmatpush1.msra.mxu0 %v505
  %1697 = vmatprep.subr.mxu0 0.0
  %1698 = vmatpush1.msra.mxu0 %v506
  %1699 = vmatprep.subr.mxu0 0.0
  %1700 = vmatpush1.msra.mxu0 %v507
  %1701 = vmatprep.subr.mxu0 0.0
  %1702 = vmatpush1.msra.mxu0 %v508
  %1703 = vmatprep.subr.mxu0 0.0
  %1704 = vmatpush1.msra.mxu0 %v509
  %1705 = vmatprep.subr.mxu0 0.0
  %1706 = vmatpush1.msra.mxu0 %v510
  %1707 = vmatprep.subr.mxu0 0.0
  %1708 = vmatpush1.msra.mxu0 %v511
  %1709 = vmatprep.subr.mxu0 0.0
  %1710 = vmatpush1.msra.mxu0 %v512
  %1711 = vmatprep.subr.mxu0 0.0
  %1712 = vmatpush1.msra.mxu0 %v513
  %1713 = vmatprep.subr.mxu0 0.0
  %1714 = vmatpush1.msra.mxu0 %v514
  %1715 = vmatprep.subr.mxu0 0.0
  %1716 = vmatpush1.msra.mxu0 %v515
  %1717 = vmatprep.subr.mxu0 0.0
  %1718 = vmatpush1.msra.mxu0 %v516
  %1719 = vmatprep.subr.mxu0 0.0
  %1720 = vmatpush1.msra.mxu0 %v517
  %1721 = vmatprep.subr.mxu0 0.0
  %1722 = vmatpush1.msra.mxu0 %v518
  %1723 = vmatprep.mubr.f32.mxu0 %v1657
  %1724 = vmatmul.mubr.f32.gmra.mrb[0].mxu0 %v1656
  %v1725 = vpop.f32.mrb[0].mxu0
  %v1726 = vadd.f32 0.0, %v1725
  %v1727 = vpop.f32.mrb[0].mxu0
  %1728 = vdwg.mxu0
  %1729 = vmatprep.subr.mxu0 0.0
  %1730 = vmatpush1.msra.mxu0 %v519
  %1731 = vmatprep.subr.mxu0 0.0
  %1732 = vmatpush1.msra.mxu0 %v520
  %1733 = vmatprep.subr.mxu0 0.0
  %1734 = vmatpush1.msra.mxu0 %v521
  %1735 = vmatprep.subr.mxu0 0.0
  %1736 = vmatpush1.msra.mxu0 %v522
  %1737 = vmatprep.subr.mxu0 0.0
  %1738 = vmatpush1.msra.mxu0 %v523
  %1739 = vmatprep.subr.mxu0 0.0
  %1740 = vmatpush1.msra.mxu0 %v524
  %1741 = vmatprep.subr.mxu0 0.0
  %1742 = vmatpush1.msra.mxu0 %v525
  %1743 = vmatprep.subr.mxu0 0.0
  %1744 = vmatpush1.msra.mxu0 %v526
  %1745 = vmatprep.subr.mxu0 0.0
  %1746 = vmatpush1.msra.mxu0 %v527
  %1747 = vmatprep.subr.mxu0 0.0
  %1748 = vmatpush1.msra.mxu0 %v528
  %1749 = vmatprep.subr.mxu0 0.0
  %1750 = vmatpush1.msra.mxu0 %v529
  %1751 = vmatprep.subr.mxu0 0.0
  %1752 = vmatpush1.msra.mxu0 %v530
  %1753 = vmatprep.subr.mxu0 0.0
  %1754 = vmatpush1.msra.mxu0 %v531
  %1755 = vmatprep.subr.mxu0 0.0
  %1756 = vmatpush1.msra.mxu0 %v532
  %1757 = vmatprep.subr.mxu0 0.0
  %1758 = vmatpush1.msra.mxu0 %v533
  %1759 = vmatprep.subr.mxu0 0.0
  %1760 = vmatpush1.msra.mxu0 %v534
  %1761 = vmatprep.subr.mxu0 0.0
  %1762 = vmatpush1.msra.mxu0 0.0
  %1763 = vmatprep.subr.mxu0 0.0
  %1764 = vmatpush1.msra.mxu0 0.0
  %1765 = vmatprep.subr.mxu0 0.0
  %1766 = vmatpush1.msra.mxu0 0.0
  %1767 = vmatprep.subr.mxu0 0.0
  %1768 = vmatpush1.msra.mxu0 0.0
  %1769 = vmatprep.subr.mxu0 0.0
  %1770 = vmatpush1.msra.mxu0 0.0
  %1771 = vmatprep.subr.mxu0 0.0
  %1772 = vmatpush1.msra.mxu0 0.0
  %1773 = vmatprep.subr.mxu0 0.0
  %1774 = vmatpush1.msra.mxu0 0.0
  %1775 = vmatprep.subr.mxu0 0.0
  %1776 = vmatpush1.msra.mxu0 0.0
  %1777 = vmatprep.subr.mxu0 0.0
  %1778 = vmatpush1.msra.mxu0 0.0
  %1779 = vmatprep.subr.mxu0 0.0
  %1780 = vmatpush1.msra.mxu0 0.0
  %1781 = vmatprep.subr.mxu0 0.0
  %1782 = vmatpush1.msra.mxu0 0.0
  %1783 = vmatprep.subr.mxu0 0.0
  %1784 = vmatpush1.msra.mxu0 0.0
  %1785 = vmatprep.subr.mxu0 0.0
  %1786 = vmatpush1.msra.mxu0 0.0
  %1787 = vmatprep.subr.mxu0 0.0
  %1788 = vmatpush1.msra.mxu0 0.0
  %1789 = vmatprep.subr.mxu0 0.0
  %1790 = vmatpush1.msra.mxu0 0.0
  %1791 = vmatprep.subr.mxu0 0.0
  %1792 = vmatpush1.msra.mxu0 0.0
  %1793 = vmatprep.mubr.f32.mxu0 0.0
  %1794 = vmatmul.mubr.f32.gmra.mrb[0].mxu0 %v1658
  %v1795 = vpop.f32.mrb[0].mxu0
  %v1796 = vadd.f32 %v1726, %v1795
  %v1797 = vpop.f32.mrb[0].mxu0
  %1798 = vdwg.mxu0
  %vm1799 = vcmask 312320
  %v1800 = vsel %vm1799, %v1796, 0.0
  %v1801 = vrot.slane %v1800, 4
  %v1802 = vadd.f32 %v1800, %v1801
  %v1803 = vrot.slane %v1802, 2
  %v1804 = vadd.f32 %v1802, %v1803
  %v1805 = vrot.slane %v1804, 1
  %v1806 = vadd.f32 %v1804, %v1805
  %v1807 = vrcp.pop 2.0
  %v1808 = vmul.f32 %v1806, %v1807
  %v1810 = vrot.slane %v1796, 2
  %v1812 = vsel %vm1799, %v1810, 0.0
  %v1813 = vrot.slane %v1812, 4
  %v1814 = vadd.f32 %v1812, %v1813
  %v1815 = vrot.slane %v1814, 2
  %v1816 = vadd.f32 %v1814, %v1815
  %v1817 = vrot.slane %v1816, 1
  %v1818 = vadd.f32 %v1816, %v1817
  %v1819 = vmul.f32 %v1818, %v1807
  %vm1820 = vcmask 1040384
  %v1821 = vsel %vm1820, %v1808, %v1819
  %v1822 = vsel %vm1799, %v1821, -inf
  %v1823 = vrot.slane %v1822, 4
  %v1824 = vmax.f32 %v1822, %v1823
  %v1825 = vrot.slane %v1824, 2
  %v1826 = vmax.f32 %v1824, %v1825
  %v1827 = vrot.slane %v1826, 1
  %v1828 = vmax.f32 %v1826, %v1827
  %v1829 = vsub.f32 %v1821, %v1828
  %v1830 = vmul.f32 %v1829, 1.442695
  %v1831 = vpow.pop %v1830
  %v1832 = vsel %vm1799, %v1831, 0.0
  %v1833 = vrot.slane %v1832, 4
  %v1834 = vadd.f32 %v1832, %v1833
  %v1835 = vrot.slane %v1834, 2
  %v1836 = vadd.f32 %v1834, %v1835
  %v1837 = vrot.slane %v1836, 1
  %v1838 = vadd.f32 %v1836, %v1837
  %v1839 = vrcp.pop %v1838
  %v1840 = vmul.f32 %v1831, %v1839
  %v1842 = vsel %vm1040, %v1840, 0
  %1844 = vmatprep.subr.mxu0 %v546
  %1845 = vmatpush1.msra.mxu0 %v545
  %1846 = vmatprep.subr.mxu0 %v549
  %1847 = vmatpush1.msra.mxu0 %v548
  %1848 = vmatprep.subr.mxu0 %v552
  %1849 = vmatpush1.msra.mxu0 %v551
  %1850 = vmatprep.subr.mxu0 %v555
  %1851 = vmatpush1.msra.mxu0 %v554
  %1852 = vmatprep.subr.mxu0 %v1049
  %1853 = vmatpush1.msra.mxu0 %v1046
  %1854 = vmatprep.subr.mxu0 0.0
  %1855 = vmatpush1.msra.mxu0 0.0
  %1856 = vmatprep.subr.mxu0 0.0
  %1857 = vmatpush1.msra.mxu0 0.0
  %1858 = vmatprep.subr.mxu0 0.0
  %1859 = vmatpush1.msra.mxu0 0.0
  %1860 = vmatprep.subr.mxu0 0.0
  %1861 = vmatpush1.msra.mxu0 0.0
  %1862 = vmatprep.subr.mxu0 0.0
  %1863 = vmatpush1.msra.mxu0 0.0
  %1864 = vmatprep.subr.mxu0 0.0
  %1865 = vmatpush1.msra.mxu0 0.0
  %1866 = vmatprep.subr.mxu0 0.0
  %1867 = vmatpush1.msra.mxu0 0.0
  %1868 = vmatprep.subr.mxu0 0.0
  %1869 = vmatpush1.msra.mxu0 0.0
  %1870 = vmatprep.subr.mxu0 0.0
  %1871 = vmatpush1.msra.mxu0 0.0
  %1872 = vmatprep.subr.mxu0 0.0
  %1873 = vmatpush1.msra.mxu0 0.0
  %1874 = vmatprep.subr.mxu0 0.0
  %1875 = vmatpush1.msra.mxu0 0.0
  %1876 = vmatprep.subr.mxu0 0.0
  %1877 = vmatpush1.msra.mxu0 0.0
  %1878 = vmatprep.subr.mxu0 0.0
  %1879 = vmatpush1.msra.mxu0 0.0
  %1880 = vmatprep.subr.mxu0 0.0
  %1881 = vmatpush1.msra.mxu0 0.0
  %1882 = vmatprep.subr.mxu0 0.0
  %1883 = vmatpush1.msra.mxu0 0.0
  %1884 = vmatprep.subr.mxu0 0.0
  %1885 = vmatpush1.msra.mxu0 0.0
  %1886 = vmatprep.subr.mxu0 0.0
  %1887 = vmatpush1.msra.mxu0 0.0
  %1888 = vmatprep.subr.mxu0 0.0
  %1889 = vmatpush1.msra.mxu0 0.0
  %1890 = vmatprep.subr.mxu0 0.0
  %1891 = vmatpush1.msra.mxu0 0.0
  %1892 = vmatprep.subr.mxu0 0.0
  %1893 = vmatpush1.msra.mxu0 0.0
  %1894 = vmatprep.subr.mxu0 0.0
  %1895 = vmatpush1.msra.mxu0 0.0
  %1896 = vmatprep.subr.mxu0 0.0
  %1897 = vmatpush1.msra.mxu0 0.0
  %1898 = vmatprep.subr.mxu0 0.0
  %1899 = vmatpush1.msra.mxu0 0.0
  %1900 = vmatprep.subr.mxu0 0.0
  %1901 = vmatpush1.msra.mxu0 0.0
  %1902 = vmatprep.subr.mxu0 0.0
  %1903 = vmatpush1.msra.mxu0 0.0
  %1904 = vmatprep.subr.mxu0 0.0
  %1905 = vmatpush1.msra.mxu0 0.0
  %1906 = vmatprep.subr.mxu0 0.0
  %1907 = vmatpush1.msra.mxu0 0.0
  %1908 = vmatprep.mubr.f32.mxu0 0.0
  %1909 = vmatmul.mubr.f32.gmra.mrb[0].mxu0 %v1842
  %v1910 = vpop.f32.mrb[0].mxu0
  %v1911 = vadd.f32 0.0, %v1910
  %v1912 = vpop.f32.mrb[0].mxu0
  %v1913 = vadd.f32 0.0, %v1912
  %1914 = vdwg.mxu0
  %1915 = vmatprep.subr.mxu0 0.0
  %1916 = vmatpush1.msra.mxu0 %v547
  %1917 = vmatprep.subr.mxu0 0.0
  %1918 = vmatpush1.msra.mxu0 %v550
  %1919 = vmatprep.subr.mxu0 0.0
  %1920 = vmatpush1.msra.mxu0 %v553
  %1921 = vmatprep.subr.mxu0 0.0
  %1922 = vmatpush1.msra.mxu0 %v556
  %1923 = vmatprep.subr.mxu0 0.0
  %1924 = vmatpush1.msra.mxu0 %v1052
  %1925 = vmatprep.subr.mxu0 0.0
  %1926 = vmatpush1.msra.mxu0 0.0
  %1927 = vmatprep.subr.mxu0 0.0
  %1928 = vmatpush1.msra.mxu0 0.0
  %1929 = vmatprep.subr.mxu0 0.0
  %1930 = vmatpush1.msra.mxu0 0.0
  %1931 = vmatprep.subr.mxu0 0.0
  %1932 = vmatpush1.msra.mxu0 0.0
  %1933 = vmatprep.subr.mxu0 0.0
  %1934 = vmatpush1.msra.mxu0 0.0
  %1935 = vmatprep.subr.mxu0 0.0
  %1936 = vmatpush1.msra.mxu0 0.0
  %1937 = vmatprep.subr.mxu0 0.0
  %1938 = vmatpush1.msra.mxu0 0.0
  %1939 = vmatprep.subr.mxu0 0.0
  %1940 = vmatpush1.msra.mxu0 0.0
  %1941 = vmatprep.subr.mxu0 0.0
  %1942 = vmatpush1.msra.mxu0 0.0
  %1943 = vmatprep.subr.mxu0 0.0
  %1944 = vmatpush1.msra.mxu0 0.0
  %1945 = vmatprep.subr.mxu0 0.0
  %1946 = vmatpush1.msra.mxu0 0.0
  %1947 = vmatprep.subr.mxu0 0.0
  %1948 = vmatpush1.msra.mxu0 0.0
  %1949 = vmatprep.subr.mxu0 0.0
  %1950 = vmatpush1.msra.mxu0 0.0
  %1951 = vmatprep.subr.mxu0 0.0
  %1952 = vmatpush1.msra.mxu0 0.0
  %1953 = vmatprep.subr.mxu0 0.0
  %1954 = vmatpush1.msra.mxu0 0.0
  %1955 = vmatprep.subr.mxu0 0.0
  %1956 = vmatpush1.msra.mxu0 0.0
  %1957 = vmatprep.subr.mxu0 0.0
  %1958 = vmatpush1.msra.mxu0 0.0
  %1959 = vmatprep.subr.mxu0 0.0
  %1960 = vmatpush1.msra.mxu0 0.0
  %1961 = vmatprep.subr.mxu0 0.0
  %1962 = vmatpush1.msra.mxu0 0.0
  %1963 = vmatprep.subr.mxu0 0.0
  %1964 = vmatpush1.msra.mxu0 0.0
  %1965 = vmatprep.subr.mxu0 0.0
  %1966 = vmatpush1.msra.mxu0 0.0
  %1967 = vmatprep.subr.mxu0 0.0
  %1968 = vmatpush1.msra.mxu0 0.0
  %1969 = vmatprep.subr.mxu0 0.0
  %1970 = vmatpush1.msra.mxu0 0.0
  %1971 = vmatprep.subr.mxu0 0.0
  %1972 = vmatpush1.msra.mxu0 0.0
  %1973 = vmatprep.subr.mxu0 0.0
  %1974 = vmatpush1.msra.mxu0 0.0
  %1975 = vmatprep.subr.mxu0 0.0
  %1976 = vmatpush1.msra.mxu0 0.0
  %1977 = vmatprep.subr.mxu0 0.0
  %1978 = vmatpush1.msra.mxu0 0.0
  %1979 = vmatprep.mubr.f32.mxu0 0.0
  %1980 = vmatmul.mubr.f32.gmra.mrb[0].mxu0 %v1842
  %v1981 = vpop.f32.mrb[0].mxu0
  %v1982 = vadd.f32 0.0, %v1981
  %v1983 = vpop.f32.mrb[0].mxu0
  %1984 = vdwg.mxu0
  %v1985 = vlaneseq
  %v1986 = vshrl.u32 %v1985, 7
  %v1987 = vsub.s32 0, %v1986
  %v1988 = vrot.slane %v1911, %v1987
  %v1989 = vlaneseq
  %v1990 = vshrl.u32 %v1989, 7
  %v1991 = vsub.s32 0, %v1990
  %v1992 = vrot.slane %v1913, %v1991
  %v1993 = vlaneseq
  %v1994 = vshrl.u32 %v1993, 7
  %v1995 = vsub.s32 0, %v1994
  %v1996 = vrot.slane %v1982, %v1995
  %v1997 = vmul.f32 %v1195, %v1988
  %v1998 = vmul.f32 %v1196, %v1992
  %v1999 = vmul.f32 %v1197, %v1996
  %v2000 = vlaneseq
  %v2001 = vshrl.u32 %v2000, 7
  %v2002 = vsub.s32 1, %v2001
  %v2003 = vrot.slane %v1911, %v2002
  %v2004 = vlaneseq
  %v2005 = vshrl.u32 %v2004, 7
  %v2006 = vsub.s32 1, %v2005
  %v2007 = vrot.slane %v1913, %v2006
  %v2008 = vlaneseq
  %v2009 = vshrl.u32 %v2008, 7
  %v2010 = vsub.s32 1, %v2009
  %v2011 = vrot.slane %v1982, %v2010
  %v2012 = vmul.f32 %v1195, %v2003
  %v2013 = vmul.f32 %v1196, %v2007
  %v2014 = vmul.f32 %v1197, %v2011
  %v2018 = vrot.slane %v2012, 6
  %v2019 = vrot.slane %v2013, 6
  %v2020 = vrot.slane %v2014, 6
  %v2024 = vsel %vm1207, %v1997, %v2018
  %v2025 = vsel %vm1207, %v1998, %v2019
  %v2026 = vsel %vm1207, %v1999, %v2020
  %2027 = vmatprep.subr.mxu0 0.0
  %2028 = vmatpush1.msra.mxu0 %v391
  %2029 = vmatprep.subr.mxu0 0.0
  %2030 = vmatpush1.msra.mxu0 %v392
  %2031 = vmatprep.subr.mxu0 0.0
  %2032 = vmatpush1.msra.mxu0 %v393
  %2033 = vmatprep.subr.mxu0 0.0
  %2034 = vmatpush1.msra.mxu0 %v394
  %2035 = vmatprep.subr.mxu0 0.0
  %2036 = vmatpush1.msra.mxu0 %v395
  %2037 = vmatprep.subr.mxu0 0.0
  %2038 = vmatpush1.msra.mxu0 %v396
  %2039 = vmatprep.subr.mxu0 0.0
  %2040 = vmatpush1.msra.mxu0 %v397
  %2041 = vmatprep.subr.mxu0 0.0
  %2042 = vmatpush1.msra.mxu0 %v398
  %2043 = vmatprep.subr.mxu0 0.0
  %2044 = vmatpush1.msra.mxu0 %v399
  %2045 = vmatprep.subr.mxu0 0.0
  %2046 = vmatpush1.msra.mxu0 %v400
  %2047 = vmatprep.subr.mxu0 0.0
  %2048 = vmatpush1.msra.mxu0 %v401
  %2049 = vmatprep.subr.mxu0 0.0
  %2050 = vmatpush1.msra.mxu0 %v402
  %2051 = vmatprep.subr.mxu0 0.0
  %2052 = vmatpush1.msra.mxu0 %v403
  %2053 = vmatprep.subr.mxu0 0.0
  %2054 = vmatpush1.msra.mxu0 %v404
  %2055 = vmatprep.subr.mxu0 0.0
  %2056 = vmatpush1.msra.mxu0 %v405
  %2057 = vmatprep.subr.mxu0 0.0
  %2058 = vmatpush1.msra.mxu0 %v406
  %2059 = vmatprep.subr.mxu0 0.0
  %2060 = vmatpush1.msra.mxu0 %v407
  %2061 = vmatprep.subr.mxu0 0.0
  %2062 = vmatpush1.msra.mxu0 %v408
  %2063 = vmatprep.subr.mxu0 0.0
  %2064 = vmatpush1.msra.mxu0 %v409
  %2065 = vmatprep.subr.mxu0 0.0
  %2066 = vmatpush1.msra.mxu0 %v410
  %2067 = vmatprep.subr.mxu0 0.0
  %2068 = vmatpush1.msra.mxu0 %v411
  %2069 = vmatprep.subr.mxu0 0.0
  %2070 = vmatpush1.msra.mxu0 %v412
  %2071 = vmatprep.subr.mxu0 0.0
  %2072 = vmatpush1.msra.mxu0 %v413
  %2073 = vmatprep.subr.mxu0 0.0
  %2074 = vmatpush1.msra.mxu0 %v414
  %2075 = vmatprep.subr.mxu0 0.0
  %2076 = vmatpush1.msra.mxu0 %v415
  %2077 = vmatprep.subr.mxu0 0.0
  %2078 = vmatpush1.msra.mxu0 %v416
  %2079 = vmatprep.subr.mxu0 0.0
  %2080 = vmatpush1.msra.mxu0 %v417
  %2081 = vmatprep.subr.mxu0 0.0
  %2082 = vmatpush1.msra.mxu0 %v418
  %2083 = vmatprep.subr.mxu0 0.0
  %2084 = vmatpush1.msra.mxu0 %v419
  %2085 = vmatprep.subr.mxu0 0.0
  %2086 = vmatpush1.msra.mxu0 %v420
  %2087 = vmatprep.subr.mxu0 0.0
  %2088 = vmatpush1.msra.mxu0 %v421
  %2089 = vmatprep.subr.mxu0 0.0
  %2090 = vmatpush1.msra.mxu0 %v422
  %2091 = vmatprep.mubr.f32.mxu0 %v2025
  %2092 = vmatmul.mubr.f32.gmra.mrb[0].mxu0 %v2024
  %v2093 = vpop.f32.mrb[0].mxu0
  %v2094 = vadd.f32 0.0, %v2093
  %v2095 = vpop.f32.mrb[0].mxu0
  %2096 = vdwg.mxu0
  %2097 = vmatprep.subr.mxu0 0.0
  %2098 = vmatpush1.msra.mxu0 %v423
  %2099 = vmatprep.subr.mxu0 0.0
  %2100 = vmatpush1.msra.mxu0 %v424
  %2101 = vmatprep.subr.mxu0 0.0
  %2102 = vmatpush1.msra.mxu0 %v425
  %2103 = vmatprep.subr.mxu0 0.0
  %2104 = vmatpush1.msra.mxu0 %v426
  %2105 = vmatprep.subr.mxu0 0.0
  %2106 = vmatpush1.msra.mxu0 %v427
  %2107 = vmatprep.subr.mxu0 0.0
  %2108 = vmatpush1.msra.mxu0 %v428
  %2109 = vmatprep.subr.mxu0 0.0
  %2110 = vmatpush1.msra.mxu0 %v429
  %2111 = vmatprep.subr.mxu0 0.0
  %2112 = vmatpush1.msra.mxu0 %v430
  %2113 = vmatprep.subr.mxu0 0.0
  %2114 = vmatpush1.msra.mxu0 %v431
  %2115 = vmatprep.subr.mxu0 0.0
  %2116 = vmatpush1.msra.mxu0 %v432
  %2117 = vmatprep.subr.mxu0 0.0
  %2118 = vmatpush1.msra.mxu0 %v433
  %2119 = vmatprep.subr.mxu0 0.0
  %2120 = vmatpush1.msra.mxu0 %v434
  %2121 = vmatprep.subr.mxu0 0.0
  %2122 = vmatpush1.msra.mxu0 %v435
  %2123 = vmatprep.subr.mxu0 0.0
  %2124 = vmatpush1.msra.mxu0 %v436
  %2125 = vmatprep.subr.mxu0 0.0
  %2126 = vmatpush1.msra.mxu0 %v437
  %2127 = vmatprep.subr.mxu0 0.0
  %2128 = vmatpush1.msra.mxu0 %v438
  %2129 = vmatprep.subr.mxu0 0.0
  %2130 = vmatpush1.msra.mxu0 0.0
  %2131 = vmatprep.subr.mxu0 0.0
  %2132 = vmatpush1.msra.mxu0 0.0
  %2133 = vmatprep.subr.mxu0 0.0
  %2134 = vmatpush1.msra.mxu0 0.0
  %2135 = vmatprep.subr.mxu0 0.0
  %2136 = vmatpush1.msra.mxu0 0.0
  %2137 = vmatprep.subr.mxu0 0.0
  %2138 = vmatpush1.msra.mxu0 0.0
  %2139 = vmatprep.subr.mxu0 0.0
  %2140 = vmatpush1.msra.mxu0 0.0
  %2141 = vmatprep.subr.mxu0 0.0
  %2142 = vmatpush1.msra.mxu0 0.0
  %2143 = vmatprep.subr.mxu0 0.0
  %2144 = vmatpush1.msra.mxu0 0.0
  %2145 = vmatprep.subr.mxu0 0.0
  %2146 = vmatpush1.msra.mxu0 0.0
  %2147 = vmatprep.subr.mxu0 0.0
  %2148 = vmatpush1.msra.mxu0 0.0
  %2149 = vmatprep.subr.mxu0 0.0
  %2150 = vmatpush1.msra.mxu0 0.0
  %2151 = vmatprep.subr.mxu0 0.0
  %2152 = vmatpush1.msra.mxu0 0.0
  %2153 = vmatprep.subr.mxu0 0.0
  %2154 = vmatpush1.msra.mxu0 0.0
  %2155 = vmatprep.subr.mxu0 0.0
  %2156 = vmatpush1.msra.mxu0 0.0
  %2157 = vmatprep.subr.mxu0 0.0
  %2158 = vmatpush1.msra.mxu0 0.0
  %2159 = vmatprep.subr.mxu0 0.0
  %2160 = vmatpush1.msra.mxu0 0.0
  %2161 = vmatprep.mubr.f32.mxu0 0.0
  %2162 = vmatmul.mubr.f32.gmra.mrb[0].mxu0 %v2026
  %v2163 = vpop.f32.mrb[0].mxu0
  %v2164 = vadd.f32 %v2094, %v2163
  %v2165 = vpop.f32.mrb[0].mxu0
  %2166 = vdwg.mxu0
  %v2167 = vmul.f32 %v2164, %v568
  %v2168 = vmul.f32 %v2167, %v2167
  %v2169 = vsel %vm1356, %v2168, 0.0
  %2170 = vadd.xlane.f32.xlu0 %v2169
  %v2171 = vpop.xlane.xlu0 %2170
  %v2172 = vadd.f32 %v2171, 1.0
  %v2173 = vrcp.pop %v2172
  %v2174 = vmul.f32 %v2171, %v2173
  %v2175 = vadd.f32 %v2171, 1e-09
  %v2176 = vrsqrt.pop %v2175
  %v2177 = vmul.f32 %v2174, %v2176
  %v2178 = vmul.f32 %v2167, %v2177
  %v2180 = vsel %vm1367, %v2178, 0
  %2182 = vmatprep.subr.mxu0 0.0
  %2183 = vmatpush1.xpose.msra.mxu0 %v1372
  %2184 = vmatprep.subr.mxu0 0.0
  %2185 = vmatpush1.xpose.msra.mxu0 %v1375
  %2186 = vmatprep.subr.mxu0 0.0
  %2187 = vmatpush1.xpose.msra.mxu0 %v1378
  %2188 = vmatprep.subr.mxu0 0.0
  %2189 = vmatpush1.xpose.msra.mxu0 %v1381
  %2190 = vmatprep.subr.mxu0 0.0
  %2191 = vmatpush1.xpose.msra.mxu0 %v1384
  %2192 = vmatprep.subr.mxu0 0.0
  %2193 = vmatpush1.xpose.msra.mxu0 %v1387
  %2194 = vmatprep.subr.mxu0 0.0
  %2195 = vmatpush1.xpose.msra.mxu0 %v1390
  %2196 = vmatprep.subr.mxu0 0.0
  %2197 = vmatpush1.xpose.msra.mxu0 %v1393
  %2198 = vmatprep.subr.mxu0 0.0
  %2199 = vmatpush1.xpose.msra.mxu0 %v1396
  %2200 = vmatprep.subr.mxu0 0.0
  %2201 = vmatpush1.xpose.msra.mxu0 %v1399
  %2202 = vmatprep.subr.mxu0 0.0
  %2203 = vmatpush1.xpose.msra.mxu0 %v1402
  %2204 = vmatprep.subr.mxu0 0.0
  %2205 = vmatpush1.xpose.msra.mxu0 %v1405
  %2206 = vmatprep.subr.mxu0 0.0
  %2207 = vmatpush1.xpose.msra.mxu0 %v1408
  %2208 = vmatprep.subr.mxu0 0.0
  %2209 = vmatpush1.xpose.msra.mxu0 %v1411
  %2210 = vmatprep.subr.mxu0 0.0
  %2211 = vmatpush1.xpose.msra.mxu0 %v1414
  %2212 = vmatprep.subr.mxu0 0.0
  %2213 = vmatpush1.xpose.msra.mxu0 %v1417
  %2214 = vmatprep.subr.mxu0 0.0
  %2215 = vmatpush1.xpose.msra.mxu0 %v1420
  %2216 = vmatprep.subr.mxu0 0.0
  %2217 = vmatpush1.xpose.msra.mxu0 %v1423
  %2218 = vmatprep.subr.mxu0 0.0
  %2219 = vmatpush1.xpose.msra.mxu0 %v1426
  %2220 = vmatprep.subr.mxu0 0.0
  %2221 = vmatpush1.xpose.msra.mxu0 %v1429
  %2222 = vmatprep.subr.mxu0 0.0
  %2223 = vmatpush1.xpose.msra.mxu0 %v1432
  %2224 = vmatprep.subr.mxu0 0.0
  %2225 = vmatpush1.xpose.msra.mxu0 %v1435
  %2226 = vmatprep.subr.mxu0 0.0
  %2227 = vmatpush1.xpose.msra.mxu0 %v1438
  %2228 = vmatprep.subr.mxu0 0.0
  %2229 = vmatpush1.xpose.msra.mxu0 %v1441
  %2230 = vmatprep.subr.mxu0 0.0
  %2231 = vmatpush1.xpose.msra.mxu0 %v1444
  %2232 = vmatprep.subr.mxu0 0.0
  %2233 = vmatpush1.xpose.msra.mxu0 %v1447
  %2234 = vmatprep.subr.mxu0 0.0
  %2235 = vmatpush1.xpose.msra.mxu0 %v1450
  %2236 = vmatprep.subr.mxu0 0.0
  %2237 = vmatpush1.xpose.msra.mxu0 %v1453
  %2238 = vmatprep.subr.mxu0 0.0
  %2239 = vmatpush1.xpose.msra.mxu0 %v1456
  %2240 = vmatprep.subr.mxu0 0.0
  %2241 = vmatpush1.xpose.msra.mxu0 %v1459
  %2242 = vmatprep.subr.mxu0 0.0
  %2243 = vmatpush1.xpose.msra.mxu0 %v1462
  %2244 = vmatprep.subr.mxu0 0.0
  %2245 = vmatpush1.xpose.msra.mxu0 %v1465
  %2246 = vmatprep.mubr.f32.mxu0 0.0
  %2247 = vmatmul.mubr.f32.gmra.mrb[0].mxu0 %v2180
  %v2248 = vpop.f32.mrb[0].mxu0
  %v2249 = vadd.f32 0.0, %v2248
  %v2250 = vpop.f32.mrb[0].mxu0
  %v2251 = vadd.f32 0.0, %v2250
  %2252 = vdwg.mxu0
  %2253 = vmatprep.subr.mxu0 0.0
  %2254 = vmatpush1.xpose.msra.mxu0 %v1468
  %2255 = vmatprep.subr.mxu0 0.0
  %2256 = vmatpush1.xpose.msra.mxu0 %v1471
  %2257 = vmatprep.subr.mxu0 0.0
  %2258 = vmatpush1.xpose.msra.mxu0 %v1474
  %2259 = vmatprep.subr.mxu0 0.0
  %2260 = vmatpush1.xpose.msra.mxu0 %v1477
  %2261 = vmatprep.subr.mxu0 0.0
  %2262 = vmatpush1.xpose.msra.mxu0 %v1480
  %2263 = vmatprep.subr.mxu0 0.0
  %2264 = vmatpush1.xpose.msra.mxu0 %v1483
  %2265 = vmatprep.subr.mxu0 0.0
  %2266 = vmatpush1.xpose.msra.mxu0 %v1486
  %2267 = vmatprep.subr.mxu0 0.0
  %2268 = vmatpush1.xpose.msra.mxu0 %v1489
  %2269 = vmatprep.subr.mxu0 0.0
  %2270 = vmatpush1.xpose.msra.mxu0 %v1492
  %2271 = vmatprep.subr.mxu0 0.0
  %2272 = vmatpush1.xpose.msra.mxu0 %v1495
  %2273 = vmatprep.subr.mxu0 0.0
  %2274 = vmatpush1.xpose.msra.mxu0 %v1498
  %2275 = vmatprep.subr.mxu0 0.0
  %2276 = vmatpush1.xpose.msra.mxu0 %v1501
  %2277 = vmatprep.subr.mxu0 0.0
  %2278 = vmatpush1.xpose.msra.mxu0 %v1504
  %2279 = vmatprep.subr.mxu0 0.0
  %2280 = vmatpush1.xpose.msra.mxu0 %v1507
  %2281 = vmatprep.subr.mxu0 0.0
  %2282 = vmatpush1.xpose.msra.mxu0 %v1510
  %2283 = vmatprep.subr.mxu0 0.0
  %2284 = vmatpush1.xpose.msra.mxu0 %v1513
  %2285 = vmatprep.subr.mxu0 0.0
  %2286 = vmatpush1.xpose.msra.mxu0 0.0
  %2287 = vmatprep.subr.mxu0 0.0
  %2288 = vmatpush1.xpose.msra.mxu0 0.0
  %2289 = vmatprep.subr.mxu0 0.0
  %2290 = vmatpush1.xpose.msra.mxu0 0.0
  %2291 = vmatprep.subr.mxu0 0.0
  %2292 = vmatpush1.xpose.msra.mxu0 0.0
  %2293 = vmatprep.subr.mxu0 0.0
  %2294 = vmatpush1.xpose.msra.mxu0 0.0
  %2295 = vmatprep.subr.mxu0 0.0
  %2296 = vmatpush1.xpose.msra.mxu0 0.0
  %2297 = vmatprep.subr.mxu0 0.0
  %2298 = vmatpush1.xpose.msra.mxu0 0.0
  %2299 = vmatprep.subr.mxu0 0.0
  %2300 = vmatpush1.xpose.msra.mxu0 0.0
  %2301 = vmatprep.subr.mxu0 0.0
  %2302 = vmatpush1.xpose.msra.mxu0 0.0
  %2303 = vmatprep.subr.mxu0 0.0
  %2304 = vmatpush1.xpose.msra.mxu0 0.0
  %2305 = vmatprep.subr.mxu0 0.0
  %2306 = vmatpush1.xpose.msra.mxu0 0.0
  %2307 = vmatprep.subr.mxu0 0.0
  %2308 = vmatpush1.xpose.msra.mxu0 0.0
  %2309 = vmatprep.subr.mxu0 0.0
  %2310 = vmatpush1.xpose.msra.mxu0 0.0
  %2311 = vmatprep.subr.mxu0 0.0
  %2312 = vmatpush1.xpose.msra.mxu0 0.0
  %2313 = vmatprep.subr.mxu0 0.0
  %2314 = vmatpush1.xpose.msra.mxu0 0.0
  %2315 = vmatprep.subr.mxu0 0.0
  %2316 = vmatpush1.xpose.msra.mxu0 0.0
  %2317 = vmatprep.mubr.f32.mxu0 0.0
  %2318 = vmatmul.mubr.f32.gmra.mrb[0].mxu0 %v2180
  %v2319 = vpop.f32.mrb[0].mxu0
  %v2320 = vadd.f32 0.0, %v2319
  %v2321 = vpop.f32.mrb[0].mxu0
  %2322 = vdwg.mxu0
  %v2323 = vmul.f32 %v1208, %v2249
  %v2324 = vmul.f32 %v1209, %v2251
  %v2325 = vmul.f32 %v1210, %v2320
  %2326 = vmatprep.subr.mxu0 0.0
  %2327 = vmatpush1.msra.mxu0 %v487
  %2328 = vmatprep.subr.mxu0 0.0
  %2329 = vmatpush1.msra.mxu0 %v488
  %2330 = vmatprep.subr.mxu0 0.0
  %2331 = vmatpush1.msra.mxu0 %v489
  %2332 = vmatprep.subr.mxu0 0.0
  %2333 = vmatpush1.msra.mxu0 %v490
  %2334 = vmatprep.subr.mxu0 0.0
  %2335 = vmatpush1.msra.mxu0 %v491
  %2336 = vmatprep.subr.mxu0 0.0
  %2337 = vmatpush1.msra.mxu0 %v492
  %2338 = vmatprep.subr.mxu0 0.0
  %2339 = vmatpush1.msra.mxu0 %v493
  %2340 = vmatprep.subr.mxu0 0.0
  %2341 = vmatpush1.msra.mxu0 %v494
  %2342 = vmatprep.subr.mxu0 0.0
  %2343 = vmatpush1.msra.mxu0 %v495
  %2344 = vmatprep.subr.mxu0 0.0
  %2345 = vmatpush1.msra.mxu0 %v496
  %2346 = vmatprep.subr.mxu0 0.0
  %2347 = vmatpush1.msra.mxu0 %v497
  %2348 = vmatprep.subr.mxu0 0.0
  %2349 = vmatpush1.msra.mxu0 %v498
  %2350 = vmatprep.subr.mxu0 0.0
  %2351 = vmatpush1.msra.mxu0 %v499
  %2352 = vmatprep.subr.mxu0 0.0
  %2353 = vmatpush1.msra.mxu0 %v500
  %2354 = vmatprep.subr.mxu0 0.0
  %2355 = vmatpush1.msra.mxu0 %v501
  %2356 = vmatprep.subr.mxu0 0.0
  %2357 = vmatpush1.msra.mxu0 %v502
  %2358 = vmatprep.subr.mxu0 0.0
  %2359 = vmatpush1.msra.mxu0 %v503
  %2360 = vmatprep.subr.mxu0 0.0
  %2361 = vmatpush1.msra.mxu0 %v504
  %2362 = vmatprep.subr.mxu0 0.0
  %2363 = vmatpush1.msra.mxu0 %v505
  %2364 = vmatprep.subr.mxu0 0.0
  %2365 = vmatpush1.msra.mxu0 %v506
  %2366 = vmatprep.subr.mxu0 0.0
  %2367 = vmatpush1.msra.mxu0 %v507
  %2368 = vmatprep.subr.mxu0 0.0
  %2369 = vmatpush1.msra.mxu0 %v508
  %2370 = vmatprep.subr.mxu0 0.0
  %2371 = vmatpush1.msra.mxu0 %v509
  %2372 = vmatprep.subr.mxu0 0.0
  %2373 = vmatpush1.msra.mxu0 %v510
  %2374 = vmatprep.subr.mxu0 0.0
  %2375 = vmatpush1.msra.mxu0 %v511
  %2376 = vmatprep.subr.mxu0 0.0
  %2377 = vmatpush1.msra.mxu0 %v512
  %2378 = vmatprep.subr.mxu0 0.0
  %2379 = vmatpush1.msra.mxu0 %v513
  %2380 = vmatprep.subr.mxu0 0.0
  %2381 = vmatpush1.msra.mxu0 %v514
  %2382 = vmatprep.subr.mxu0 0.0
  %2383 = vmatpush1.msra.mxu0 %v515
  %2384 = vmatprep.subr.mxu0 0.0
  %2385 = vmatpush1.msra.mxu0 %v516
  %2386 = vmatprep.subr.mxu0 0.0
  %2387 = vmatpush1.msra.mxu0 %v517
  %2388 = vmatprep.subr.mxu0 0.0
  %2389 = vmatpush1.msra.mxu0 %v518
  %2390 = vmatprep.mubr.f32.mxu0 %v2324
  %2391 = vmatmul.mubr.f32.gmra.mrb[0].mxu0 %v2323
  %v2392 = vpop.f32.mrb[0].mxu0
  %v2393 = vadd.f32 0.0, %v2392
  %v2394 = vpop.f32.mrb[0].mxu0
  %2395 = vdwg.mxu0
  %2396 = vmatprep.subr.mxu0 0.0
  %2397 = vmatpush1.msra.mxu0 %v519
  %2398 = vmatprep.subr.mxu0 0.0
  %2399 = vmatpush1.msra.mxu0 %v520
  %2400 = vmatprep.subr.mxu0 0.0
  %2401 = vmatpush1.msra.mxu0 %v521
  %2402 = vmatprep.subr.mxu0 0.0
  %2403 = vmatpush1.msra.mxu0 %v522
  %2404 = vmatprep.subr.mxu0 0.0
  %2405 = vmatpush1.msra.mxu0 %v523
  %2406 = vmatprep.subr.mxu0 0.0
  %2407 = vmatpush1.msra.mxu0 %v524
  %2408 = vmatprep.subr.mxu0 0.0
  %2409 = vmatpush1.msra.mxu0 %v525
  %2410 = vmatprep.subr.mxu0 0.0
  %2411 = vmatpush1.msra.mxu0 %v526
  %2412 = vmatprep.subr.mxu0 0.0
  %2413 = vmatpush1.msra.mxu0 %v527
  %2414 = vmatprep.subr.mxu0 0.0
  %2415 = vmatpush1.msra.mxu0 %v528
  %2416 = vmatprep.subr.mxu0 0.0
  %2417 = vmatpush1.msra.mxu0 %v529
  %2418 = vmatprep.subr.mxu0 0.0
  %2419 = vmatpush1.msra.mxu0 %v530
  %2420 = vmatprep.subr.mxu0 0.0
  %2421 = vmatpush1.msra.mxu0 %v531
  %2422 = vmatprep.subr.mxu0 0.0
  %2423 = vmatpush1.msra.mxu0 %v532
  %2424 = vmatprep.subr.mxu0 0.0
  %2425 = vmatpush1.msra.mxu0 %v533
  %2426 = vmatprep.subr.mxu0 0.0
  %2427 = vmatpush1.msra.mxu0 %v534
  %2428 = vmatprep.subr.mxu0 0.0
  %2429 = vmatpush1.msra.mxu0 0.0
  %2430 = vmatprep.subr.mxu0 0.0
  %2431 = vmatpush1.msra.mxu0 0.0
  %2432 = vmatprep.subr.mxu0 0.0
  %2433 = vmatpush1.msra.mxu0 0.0
  %2434 = vmatprep.subr.mxu0 0.0
  %2435 = vmatpush1.msra.mxu0 0.0
  %2436 = vmatprep.subr.mxu0 0.0
  %2437 = vmatpush1.msra.mxu0 0.0
  %2438 = vmatprep.subr.mxu0 0.0
  %2439 = vmatpush1.msra.mxu0 0.0
  %2440 = vmatprep.subr.mxu0 0.0
  %2441 = vmatpush1.msra.mxu0 0.0
  %2442 = vmatprep.subr.mxu0 0.0
  %2443 = vmatpush1.msra.mxu0 0.0
  %2444 = vmatprep.subr.mxu0 0.0
  %2445 = vmatpush1.msra.mxu0 0.0
  %2446 = vmatprep.subr.mxu0 0.0
  %2447 = vmatpush1.msra.mxu0 0.0
  %2448 = vmatprep.subr.mxu0 0.0
  %2449 = vmatpush1.msra.mxu0 0.0
  %2450 = vmatprep.subr.mxu0 0.0
  %2451 = vmatpush1.msra.mxu0 0.0
  %2452 = vmatprep.subr.mxu0 0.0
  %2453 = vmatpush1.msra.mxu0 0.0
  %2454 = vmatprep.subr.mxu0 0.0
  %2455 = vmatpush1.msra.mxu0 0.0
  %2456 = vmatprep.subr.mxu0 0.0
  %2457 = vmatpush1.msra.mxu0 0.0
  %2458 = vmatprep.subr.mxu0 0.0
  %2459 = vmatpush1.msra.mxu0 0.0
  %2460 = vmatprep.mubr.f32.mxu0 0.0
  %2461 = vmatmul.mubr.f32.gmra.mrb[0].mxu0 %v2325
  %v2462 = vpop.f32.mrb[0].mxu0
  %v2463 = vadd.f32 %v2393, %v2462
  %v2464 = vpop.f32.mrb[0].mxu0
  %2465 = vdwg.mxu0
  %v2466 = vsel %vm1799, %v2463, 0.0
  %v2467 = vrot.slane %v2466, 4
  %v2468 = vadd.f32 %v2466, %v2467
  %v2469 = vrot.slane %v2468, 2
  %v2470 = vadd.f32 %v2468, %v2469
  %v2471 = vrot.slane %v2470, 1
  %v2472 = vadd.f32 %v2470, %v2471
  %v2473 = vmul.f32 %v2472, %v1807
  %v2475 = vrot.slane %v2463, 2
  %v2477 = vsel %vm1799, %v2475, 0.0
  %v2478 = vrot.slane %v2477, 4
  %v2479 = vadd.f32 %v2477, %v2478
  %v2480 = vrot.slane %v2479, 2
  %v2481 = vadd.f32 %v2479, %v2480
  %v2482 = vrot.slane %v2481, 1
  %v2483 = vadd.f32 %v2481, %v2482
  %v2484 = vmul.f32 %v2483, %v1807
  %v2485 = vsel %vm1820, %v2473, %v2484
  %v2486 = vadd.f32 %v1821, %v2485
  %v2487 = vsel %vm1799, %v2486, -inf
  %v2488 = vrot.slane %v2487, 4
  %v2489 = vmax.f32 %v2487, %v2488
  %v2490 = vrot.slane %v2489, 2
  %v2491 = vmax.f32 %v2489, %v2490
  %v2492 = vrot.slane %v2491, 1
  %v2493 = vmax.f32 %v2491, %v2492
  %v2494 = vsub.f32 %v2486, %v2493
  %v2495 = vmul.f32 %v2494, 1.442695
  %v2496 = vpow.pop %v2495
  %v2497 = vsel %vm1799, %v2496, 0.0
  %v2498 = vrot.slane %v2497, 4
  %v2499 = vadd.f32 %v2497, %v2498
  %v2500 = vrot.slane %v2499, 2
  %v2501 = vadd.f32 %v2499, %v2500
  %v2502 = vrot.slane %v2501, 1
  %v2503 = vadd.f32 %v2501, %v2502
  %v2504 = vrcp.pop %v2503
  %v2505 = vmul.f32 %v2496, %v2504
  %v2507 = vsel %vm1040, %v2505, 0
  %2509 = vmatprep.subr.mxu0 %v546
  %2510 = vmatpush1.msra.mxu0 %v545
  %2511 = vmatprep.subr.mxu0 %v549
  %2512 = vmatpush1.msra.mxu0 %v548
  %2513 = vmatprep.subr.mxu0 %v552
  %2514 = vmatpush1.msra.mxu0 %v551
  %2515 = vmatprep.subr.mxu0 %v555
  %2516 = vmatpush1.msra.mxu0 %v554
  %2517 = vmatprep.subr.mxu0 %v1049
  %2518 = vmatpush1.msra.mxu0 %v1046
  %2519 = vmatprep.subr.mxu0 0.0
  %2520 = vmatpush1.msra.mxu0 0.0
  %2521 = vmatprep.subr.mxu0 0.0
  %2522 = vmatpush1.msra.mxu0 0.0
  %2523 = vmatprep.subr.mxu0 0.0
  %2524 = vmatpush1.msra.mxu0 0.0
  %2525 = vmatprep.subr.mxu0 0.0
  %2526 = vmatpush1.msra.mxu0 0.0
  %2527 = vmatprep.subr.mxu0 0.0
  %2528 = vmatpush1.msra.mxu0 0.0
  %2529 = vmatprep.subr.mxu0 0.0
  %2530 = vmatpush1.msra.mxu0 0.0
  %2531 = vmatprep.subr.mxu0 0.0
  %2532 = vmatpush1.msra.mxu0 0.0
  %2533 = vmatprep.subr.mxu0 0.0
  %2534 = vmatpush1.msra.mxu0 0.0
  %2535 = vmatprep.subr.mxu0 0.0
  %2536 = vmatpush1.msra.mxu0 0.0
  %2537 = vmatprep.subr.mxu0 0.0
  %2538 = vmatpush1.msra.mxu0 0.0
  %2539 = vmatprep.subr.mxu0 0.0
  %2540 = vmatpush1.msra.mxu0 0.0
  %2541 = vmatprep.subr.mxu0 0.0
  %2542 = vmatpush1.msra.mxu0 0.0
  %2543 = vmatprep.subr.mxu0 0.0
  %2544 = vmatpush1.msra.mxu0 0.0
  %2545 = vmatprep.subr.mxu0 0.0
  %2546 = vmatpush1.msra.mxu0 0.0
  %2547 = vmatprep.subr.mxu0 0.0
  %2548 = vmatpush1.msra.mxu0 0.0
  %2549 = vmatprep.subr.mxu0 0.0
  %2550 = vmatpush1.msra.mxu0 0.0
  %2551 = vmatprep.subr.mxu0 0.0
  %2552 = vmatpush1.msra.mxu0 0.0
  %2553 = vmatprep.subr.mxu0 0.0
  %2554 = vmatpush1.msra.mxu0 0.0
  %2555 = vmatprep.subr.mxu0 0.0
  %2556 = vmatpush1.msra.mxu0 0.0
  %2557 = vmatprep.subr.mxu0 0.0
  %2558 = vmatpush1.msra.mxu0 0.0
  %2559 = vmatprep.subr.mxu0 0.0
  %2560 = vmatpush1.msra.mxu0 0.0
  %2561 = vmatprep.subr.mxu0 0.0
  %2562 = vmatpush1.msra.mxu0 0.0
  %2563 = vmatprep.subr.mxu0 0.0
  %2564 = vmatpush1.msra.mxu0 0.0
  %2565 = vmatprep.subr.mxu0 0.0
  %2566 = vmatpush1.msra.mxu0 0.0
  %2567 = vmatprep.subr.mxu0 0.0
  %2568 = vmatpush1.msra.mxu0 0.0
  %2569 = vmatprep.subr.mxu0 0.0
  %2570 = vmatpush1.msra.mxu0 0.0
  %2571 = vmatprep.subr.mxu0 0.0
  %2572 = vmatpush1.msra.mxu0 0.0
  %2573 = vmatprep.mubr.f32.mxu0 0.0
  %2574 = vmatmul.mubr.f32.gmra.mrb[0].mxu0 %v2507
  %v2575 = vpop.f32.mrb[0].mxu0
  %v2576 = vadd.f32 0.0, %v2575
  %v2577 = vpop.f32.mrb[0].mxu0
  %v2578 = vadd.f32 0.0, %v2577
  %2579 = vdwg.mxu0
  %2580 = vmatprep.subr.mxu0 0.0
  %2581 = vmatpush1.msra.mxu0 %v547
  %2582 = vmatprep.subr.mxu0 0.0
  %2583 = vmatpush1.msra.mxu0 %v550
  %2584 = vmatprep.subr.mxu0 0.0
  %2585 = vmatpush1.msra.mxu0 %v553
  %2586 = vmatprep.subr.mxu0 0.0
  %2587 = vmatpush1.msra.mxu0 %v556
  %2588 = vmatprep.subr.mxu0 0.0
  %2589 = vmatpush1.msra.mxu0 %v1052
  %2590 = vmatprep.subr.mxu0 0.0
  %2591 = vmatpush1.msra.mxu0 0.0
  %2592 = vmatprep.subr.mxu0 0.0
  %2593 = vmatpush1.msra.mxu0 0.0
  %2594 = vmatprep.subr.mxu0 0.0
  %2595 = vmatpush1.msra.mxu0 0.0
  %2596 = vmatprep.subr.mxu0 0.0
  %2597 = vmatpush1.msra.mxu0 0.0
  %2598 = vmatprep.subr.mxu0 0.0
  %2599 = vmatpush1.msra.mxu0 0.0
  %2600 = vmatprep.subr.mxu0 0.0
  %2601 = vmatpush1.msra.mxu0 0.0
  %2602 = vmatprep.subr.mxu0 0.0
  %2603 = vmatpush1.msra.mxu0 0.0
  %2604 = vmatprep.subr.mxu0 0.0
  %2605 = vmatpush1.msra.mxu0 0.0
  %2606 = vmatprep.subr.mxu0 0.0
  %2607 = vmatpush1.msra.mxu0 0.0
  %2608 = vmatprep.subr.mxu0 0.0
  %2609 = vmatpush1.msra.mxu0 0.0
  %2610 = vmatprep.subr.mxu0 0.0
  %2611 = vmatpush1.msra.mxu0 0.0
  %2612 = vmatprep.subr.mxu0 0.0
  %2613 = vmatpush1.msra.mxu0 0.0
  %2614 = vmatprep.subr.mxu0 0.0
  %2615 = vmatpush1.msra.mxu0 0.0
  %2616 = vmatprep.subr.mxu0 0.0
  %2617 = vmatpush1.msra.mxu0 0.0
  %2618 = vmatprep.subr.mxu0 0.0
  %2619 = vmatpush1.msra.mxu0 0.0
  %2620 = vmatprep.subr.mxu0 0.0
  %2621 = vmatpush1.msra.mxu0 0.0
  %2622 = vmatprep.subr.mxu0 0.0
  %2623 = vmatpush1.msra.mxu0 0.0
  %2624 = vmatprep.subr.mxu0 0.0
  %2625 = vmatpush1.msra.mxu0 0.0
  %2626 = vmatprep.subr.mxu0 0.0
  %2627 = vmatpush1.msra.mxu0 0.0
  %2628 = vmatprep.subr.mxu0 0.0
  %2629 = vmatpush1.msra.mxu0 0.0
  %2630 = vmatprep.subr.mxu0 0.0
  %2631 = vmatpush1.msra.mxu0 0.0
  %2632 = vmatprep.subr.mxu0 0.0
  %2633 = vmatpush1.msra.mxu0 0.0
  %2634 = vmatprep.subr.mxu0 0.0
  %2635 = vmatpush1.msra.mxu0 0.0
  %2636 = vmatprep.subr.mxu0 0.0
  %2637 = vmatpush1.msra.mxu0 0.0
  %2638 = vmatprep.subr.mxu0 0.0
  %2639 = vmatpush1.msra.mxu0 0.0
  %2640 = vmatprep.subr.mxu0 0.0
  %2641 = vmatpush1.msra.mxu0 0.0
  %2642 = vmatprep.subr.mxu0 0.0
  %2643 = vmatpush1.msra.mxu0 0.0
  %2644 = vmatprep.mubr.f32.mxu0 0.0
  %2645 = vmatmul.mubr.f32.gmra.mrb[0].mxu0 %v2507
  %v2646 = vpop.f32.mrb[0].mxu0
  %v2647 = vadd.f32 0.0, %v2646
  %v2648 = vpop.f32.mrb[0].mxu0
  %2649 = vdwg.mxu0
  %v2650 = vlaneseq
  %v2651 = vshrl.u32 %v2650, 7
  %v2652 = vsub.s32 0, %v2651
  %v2653 = vrot.slane %v2576, %v2652
  %v2654 = vlaneseq
  %v2655 = vshrl.u32 %v2654, 7
  %v2656 = vsub.s32 0, %v2655
  %v2657 = vrot.slane %v2578, %v2656
  %v2658 = vlaneseq
  %v2659 = vshrl.u32 %v2658, 7
  %v2660 = vsub.s32 0, %v2659
  %v2661 = vrot.slane %v2647, %v2660
  %v2662 = vmul.f32 %v1195, %v2653
  %v2663 = vmul.f32 %v1196, %v2657
  %v2664 = vmul.f32 %v1197, %v2661
  %v2665 = vlaneseq
  %v2666 = vshrl.u32 %v2665, 7
  %v2667 = vsub.s32 1, %v2666
  %v2668 = vrot.slane %v2576, %v2667
  %v2669 = vlaneseq
  %v2670 = vshrl.u32 %v2669, 7
  %v2671 = vsub.s32 1, %v2670
  %v2672 = vrot.slane %v2578, %v2671
  %v2673 = vlaneseq
  %v2674 = vshrl.u32 %v2673, 7
  %v2675 = vsub.s32 1, %v2674
  %v2676 = vrot.slane %v2647, %v2675
  %v2677 = vmul.f32 %v1195, %v2668
  %v2678 = vmul.f32 %v1196, %v2672
  %v2679 = vmul.f32 %v1197, %v2676
  %v2683 = vrot.slane %v2677, 6
  %v2684 = vrot.slane %v2678, 6
  %v2685 = vrot.slane %v2679, 6
  %v2689 = vsel %vm1207, %v2662, %v2683
  %v2690 = vsel %vm1207, %v2663, %v2684
  %v2691 = vsel %vm1207, %v2664, %v2685
  %2692 = vmatprep.subr.mxu0 0.0
  %2693 = vmatpush1.msra.mxu0 %v391
  %2694 = vmatprep.subr.mxu0 0.0
  %2695 = vmatpush1.msra.mxu0 %v392
  %2696 = vmatprep.subr.mxu0 0.0
  %2697 = vmatpush1.msra.mxu0 %v393
  %2698 = vmatprep.subr.mxu0 0.0
  %2699 = vmatpush1.msra.mxu0 %v394
  %2700 = vmatprep.subr.mxu0 0.0
  %2701 = vmatpush1.msra.mxu0 %v395
  %2702 = vmatprep.subr.mxu0 0.0
  %2703 = vmatpush1.msra.mxu0 %v396
  %2704 = vmatprep.subr.mxu0 0.0
  %2705 = vmatpush1.msra.mxu0 %v397
  %2706 = vmatprep.subr.mxu0 0.0
  %2707 = vmatpush1.msra.mxu0 %v398
  %2708 = vmatprep.subr.mxu0 0.0
  %2709 = vmatpush1.msra.mxu0 %v399
  %2710 = vmatprep.subr.mxu0 0.0
  %2711 = vmatpush1.msra.mxu0 %v400
  %2712 = vmatprep.subr.mxu0 0.0
  %2713 = vmatpush1.msra.mxu0 %v401
  %2714 = vmatprep.subr.mxu0 0.0
  %2715 = vmatpush1.msra.mxu0 %v402
  %2716 = vmatprep.subr.mxu0 0.0
  %2717 = vmatpush1.msra.mxu0 %v403
  %2718 = vmatprep.subr.mxu0 0.0
  %2719 = vmatpush1.msra.mxu0 %v404
  %2720 = vmatprep.subr.mxu0 0.0
  %2721 = vmatpush1.msra.mxu0 %v405
  %2722 = vmatprep.subr.mxu0 0.0
  %2723 = vmatpush1.msra.mxu0 %v406
  %2724 = vmatprep.subr.mxu0 0.0
  %2725 = vmatpush1.msra.mxu0 %v407
  %2726 = vmatprep.subr.mxu0 0.0
  %2727 = vmatpush1.msra.mxu0 %v408
  %2728 = vmatprep.subr.mxu0 0.0
  %2729 = vmatpush1.msra.mxu0 %v409
  %2730 = vmatprep.subr.mxu0 0.0
  %2731 = vmatpush1.msra.mxu0 %v410
  %2732 = vmatprep.subr.mxu0 0.0
  %2733 = vmatpush1.msra.mxu0 %v411
  %2734 = vmatprep.subr.mxu0 0.0
  %2735 = vmatpush1.msra.mxu0 %v412
  %2736 = vmatprep.subr.mxu0 0.0
  %2737 = vmatpush1.msra.mxu0 %v413
  %2738 = vmatprep.subr.mxu0 0.0
  %2739 = vmatpush1.msra.mxu0 %v414
  %2740 = vmatprep.subr.mxu0 0.0
  %2741 = vmatpush1.msra.mxu0 %v415
  %2742 = vmatprep.subr.mxu0 0.0
  %2743 = vmatpush1.msra.mxu0 %v416
  %2744 = vmatprep.subr.mxu0 0.0
  %2745 = vmatpush1.msra.mxu0 %v417
  %2746 = vmatprep.subr.mxu0 0.0
  %2747 = vmatpush1.msra.mxu0 %v418
  %2748 = vmatprep.subr.mxu0 0.0
  %2749 = vmatpush1.msra.mxu0 %v419
  %2750 = vmatprep.subr.mxu0 0.0
  %2751 = vmatpush1.msra.mxu0 %v420
  %2752 = vmatprep.subr.mxu0 0.0
  %2753 = vmatpush1.msra.mxu0 %v421
  %2754 = vmatprep.subr.mxu0 0.0
  %2755 = vmatpush1.msra.mxu0 %v422
  %2756 = vmatprep.mubr.f32.mxu0 %v2690
  %2757 = vmatmul.mubr.f32.gmra.mrb[0].mxu0 %v2689
  %v2758 = vpop.f32.mrb[0].mxu0
  %v2759 = vadd.f32 0.0, %v2758
  %v2760 = vpop.f32.mrb[0].mxu0
  %2761 = vdwg.mxu0
  %2762 = vmatprep.subr.mxu0 0.0
  %2763 = vmatpush1.msra.mxu0 %v423
  %2764 = vmatprep.subr.mxu0 0.0
  %2765 = vmatpush1.msra.mxu0 %v424
  %2766 = vmatprep.subr.mxu0 0.0
  %2767 = vmatpush1.msra.mxu0 %v425
  %2768 = vmatprep.subr.mxu0 0.0
  %2769 = vmatpush1.msra.mxu0 %v426
  %2770 = vmatprep.subr.mxu0 0.0
  %2771 = vmatpush1.msra.mxu0 %v427
  %2772 = vmatprep.subr.mxu0 0.0
  %2773 = vmatpush1.msra.mxu0 %v428
  %2774 = vmatprep.subr.mxu0 0.0
  %2775 = vmatpush1.msra.mxu0 %v429
  %2776 = vmatprep.subr.mxu0 0.0
  %2777 = vmatpush1.msra.mxu0 %v430
  %2778 = vmatprep.subr.mxu0 0.0
  %2779 = vmatpush1.msra.mxu0 %v431
  %2780 = vmatprep.subr.mxu0 0.0
  %2781 = vmatpush1.msra.mxu0 %v432
  %2782 = vmatprep.subr.mxu0 0.0
  %2783 = vmatpush1.msra.mxu0 %v433
  %2784 = vmatprep.subr.mxu0 0.0
  %2785 = vmatpush1.msra.mxu0 %v434
  %2786 = vmatprep.subr.mxu0 0.0
  %2787 = vmatpush1.msra.mxu0 %v435
  %2788 = vmatprep.subr.mxu0 0.0
  %2789 = vmatpush1.msra.mxu0 %v436
  %2790 = vmatprep.subr.mxu0 0.0
  %2791 = vmatpush1.msra.mxu0 %v437
  %2792 = vmatprep.subr.mxu0 0.0
  %2793 = vmatpush1.msra.mxu0 %v438
  %2794 = vmatprep.subr.mxu0 0.0
  %2795 = vmatpush1.msra.mxu0 0.0
  %2796 = vmatprep.subr.mxu0 0.0
  %2797 = vmatpush1.msra.mxu0 0.0
  %2798 = vmatprep.subr.mxu0 0.0
  %2799 = vmatpush1.msra.mxu0 0.0
  %2800 = vmatprep.subr.mxu0 0.0
  %2801 = vmatpush1.msra.mxu0 0.0
  %2802 = vmatprep.subr.mxu0 0.0
  %2803 = vmatpush1.msra.mxu0 0.0
  %2804 = vmatprep.subr.mxu0 0.0
  %2805 = vmatpush1.msra.mxu0 0.0
  %2806 = vmatprep.subr.mxu0 0.0
  %2807 = vmatpush1.msra.mxu0 0.0
  %2808 = vmatprep.subr.mxu0 0.0
  %2809 = vmatpush1.msra.mxu0 0.0
  %2810 = vmatprep.subr.mxu0 0.0
  %2811 = vmatpush1.msra.mxu0 0.0
  %2812 = vmatprep.subr.mxu0 0.0
  %2813 = vmatpush1.msra.mxu0 0.0
  %2814 = vmatprep.subr.mxu0 0.0
  %2815 = vmatpush1.msra.mxu0 0.0
  %2816 = vmatprep.subr.mxu0 0.0
  %2817 = vmatpush1.msra.mxu0 0.0
  %2818 = vmatprep.subr.mxu0 0.0
  %2819 = vmatpush1.msra.mxu0 0.0
  %2820 = vmatprep.subr.mxu0 0.0
  %2821 = vmatpush1.msra.mxu0 0.0
  %2822 = vmatprep.subr.mxu0 0.0
  %2823 = vmatpush1.msra.mxu0 0.0
  %2824 = vmatprep.subr.mxu0 0.0
  %2825 = vmatpush1.msra.mxu0 0.0
  %2826 = vmatprep.mubr.f32.mxu0 0.0
  %2827 = vmatmul.mubr.f32.gmra.mrb[0].mxu0 %v2691
  %v2828 = vpop.f32.mrb[0].mxu0
  %v2829 = vadd.f32 %v2759, %v2828
  %v2830 = vpop.f32.mrb[0].mxu0
  %2831 = vdwg.mxu0
  %v2832 = vmul.f32 %v2829, %v568
  %v2833 = vmul.f32 %v2832, %v2832
  %v2834 = vsel %vm1356, %v2833, 0.0
  %2835 = vadd.xlane.f32.xlu0 %v2834
  %v2836 = vpop.xlane.xlu0 %2835
  %v2837 = vadd.f32 %v2836, 1.0
  %v2838 = vrcp.pop %v2837
  %v2839 = vmul.f32 %v2836, %v2838
  %v2840 = vadd.f32 %v2836, 1e-09
  %v2841 = vrsqrt.pop %v2840
  %v2842 = vmul.f32 %v2839, %v2841
  %v2843 = vmul.f32 %v2832, %v2842
  %v2845 = vrot.slane %v2843, 2
  %v2847 = vadd.f32 %v2843, %v2845
  %vm2848 = vcmask 254976
  %2849 = vst.msk [vmem:[%s6] sm:$0x3] %vm2848, %v2847
  // Predicated region
  $region26: #{simple_classifier_forward.1} parent=0 // pred_check
    _
  $region27: #{simple_classifier_forward.1} parent=0 // pred_check_branch
    %2851 = sbr.rel (0) target = $region29
  $region28: #{simple_classifier_forward.1} parent=0 // pred_region
    _
  $region29: #{simple_classifier_forward.1} parent=0 // pred_fallthru
    _
  // Predicated region
  $region30: #{simple_classifier_forward.1} parent=0 // pred_check
    _
  $region31: #{simple_classifier_forward.1} parent=0 // pred_check_branch
    %2853 = sbr.rel (0) target = $region33
  $region32: #{simple_classifier_forward.1} parent=0 // pred_region
    _
  $region33: #{simple_classifier_forward.1} parent=0 // pred_fallthru
    _

</llo_original>
